<compile_context>
chip_gen: v7x
topology: tpu7x:2x2x1
jax: 0.10.0
libtpu: 0.0.40
codegen_flags: <defaults>
</compile_context>

<pallas_src>
import math
import functools

import jax
import jax.numpy as jnp
from jax import lax
from jax.experimental import pallas as pl
from jax.experimental.pallas import tpu as pltpu

LATENT_DIM = 64
HIDDEN_DIM = 128
NUM_TOKENS = 32
IN_FEATURES = 128
OUT_FEATURES = 128
POS_FREQS = 32
COMBINED_DIM = LATENT_DIM + 2 * POS_FREQS  # 128

_INV_SQRT2 = 1.0 / math.sqrt(2.0)
_LN_EPS = 1e-5
_NORM_EPS = 1e-12

# Row indices inside the packed (16, 128) vector-parameter array.
_VG1, _VBE1 = 0, 1
_VB2, _VG2, _VBE2 = 2, 3, 4
_VBK1, _VGK, _VBEK, _VBK2 = 5, 6, 7, 8
_VBV1, _VGV, _VBEV, _VBV2 = 9, 10, 11, 12
_VEC_ROWS = 16  # padded to a sublane multiple

# Lane offsets inside the packed (128, 640) weight slab.
_W2_LO, _W2_HI = 0, HIDDEN_DIM                      # (128, 128)
_WKV1_LO, _WKV1_HI = HIDDEN_DIM, 3 * HIDDEN_DIM     # (128, 256) fused k/v L1
_WK2_LO, _WK2_HI = 3 * HIDDEN_DIM, 4 * HIDDEN_DIM   # (128, 128)
_WV2_LO, _WV2_HI = 4 * HIDDEN_DIM, 5 * HIDDEN_DIM   # (128, 128)
_WBIG_COLS = 5 * HIDDEN_DIM                         # 640


def _layernorm(x, gamma, beta):
    # One-pass statistics: mean and E[x^2] are independent XLU reductions.
    mean = jnp.mean(x, axis=-1, keepdims=True)
    meansq = jnp.mean(x * x, axis=-1, keepdims=True)
    var = meansq - mean * mean
    return (x - mean) * lax.rsqrt(var + _LN_EPS) * gamma + beta


def _gelu_exact(x):
    # nn.GELU() default in PyTorch is the exact erf-based GELU.
    return 0.5 * x * (1.0 + lax.erf(x * _INV_SQRT2))


def _l2_normalize(x):
    # matches torch.nn.functional.normalize(dim=-1, eps=1e-12):
    # x / max(||x||, eps) == x * rsqrt(max(||x||^2, eps^2))
    sumsq = jnp.sum(x * x, axis=-1, keepdims=True)
    return x * lax.rsqrt(jnp.maximum(sumsq, _NORM_EPS * _NORM_EPS))


def token_generator_kernel(
    z_ref,       # (tile_b, LATENT_DIM)
    posw_ref,    # (NUM_TOKENS, HIDDEN_DIM)  = pos_enc @ w1_pos + b1  (constant)
    w1z_ref,     # (LATENT_DIM, HIDDEN_DIM)
    wbig_ref,    # (HIDDEN_DIM, 640) packed [w2 | wkv1 | wk2 | wv2]
    vec_ref,     # (16, HIDDEN_DIM) packed biases / LN gammas / LN betas
    keys_ref,    # (tile_b*NUM_TOKENS, IN_FEATURES)
    vals_ref,    # (tile_b*NUM_TOKENS, OUT_FEATURES)
):
    tile_b = z_ref.shape[0]
    vec = vec_ref[...]

    def row(i):
        return vec[i:i + 1, :]  # (1, HIDDEN_DIM), static sublane slice

    # ---- shared_net layer 1 (split w1: z-part on MXU, pos-part precomputed) ----
    zw = jnp.dot(z_ref[...], w1z_ref[...],
                 preferred_element_type=jnp.float32)              # (tile_b, H)
    h = zw[:, None, :] + posw_ref[...][None, :, :]                # (tile_b, T, H)
    h = h.reshape(tile_b * NUM_TOKENS, HIDDEN_DIM)                # (rows, H)
    h = _gelu_exact(_layernorm(h, row(_VG1), row(_VBE1)))

    # ---- shared_net layer 2 (lane-aligned static slice of the weight slab) ----
    h = jnp.dot(h, wbig_ref[:, _W2_LO:_W2_HI],
                preferred_element_type=jnp.float32) + row(_VB2)
    h = _gelu_exact(_layernorm(h, row(_VG2), row(_VBE2)))

    # ---- key_net / value_net first matmuls fused (N = 256 fills wide MXU) ----
    kv = jnp.dot(h, wbig_ref[:, _WKV1_LO:_WKV1_HI],
                 preferred_element_type=jnp.float32)              # (rows, 2H)
    k = _gelu_exact(_layernorm(kv[:, :HIDDEN_DIM] + row(_VBK1),
                               row(_VGK), row(_VBEK)))
    v = _gelu_exact(_layernorm(kv[:, HIDDEN_DIM:] + row(_VBV1),
                               row(_VGV), row(_VBEV)))

    # ---- final projections + L2 normalize ----
    k = jnp.dot(k, wbig_ref[:, _WK2_LO:_WK2_HI],
                preferred_element_type=jnp.float32) + row(_VBK2)
    v = jnp.dot(v, wbig_ref[:, _WV2_LO:_WV2_HI],
                preferred_element_type=jnp.float32) + row(_VBV2)

    keys_ref[...] = _l2_normalize(k)
    vals_ref[...] = _l2_normalize(v)


def make_pos_encodings():
    positions = jnp.linspace(0.0, 1.0, NUM_TOKENS)[:, None]       # (T, 1)
    freqs = jnp.linspace(1.0, 10.0, POS_FREQS)[None, :]           # (1, F)
    angles = positions * freqs * 2.0 * math.pi                    # (T, F)
    return jnp.concatenate([jnp.sin(angles), jnp.cos(angles)], axis=-1)  # (T, 2F)


def init_params(key):
    """Deterministic init mimicking nn.Linear defaults (U(-1/sqrt(fan_in), ...)).
    Linear weights are stored transposed as (in, out) so the kernel does x @ W."""
    params = {}

    def linear(key, fan_in, fan_out):
        k1, k2 = jax.random.split(key)
        bound = 1.0 / math.sqrt(fan_in)
        w = jax.random.uniform(k1, (fan_in, fan_out), jnp.float32, -bound, bound)
        b = jax.random.uniform(k2, (1, fan_out), jnp.float32, -bound, bound)
        return w, b

    keys = jax.random.split(key, 6)
    params["w1"], params["b1"] = linear(keys[0], COMBINED_DIM, HIDDEN_DIM)
    params["w2"], params["b2"] = linear(keys[1], HIDDEN_DIM, HIDDEN_DIM)
    params["wk1"], params["bk1"] = linear(keys[2], HIDDEN_DIM, HIDDEN_DIM)
    params["wk2"], params["bk2"] = linear(keys[3], HIDDEN_DIM, IN_FEATURES)
    params["wv1"], params["bv1"] = linear(keys[4], HIDDEN_DIM, HIDDEN_DIM)
    params["wv2"], params["bv2"] = linear(keys[5], HIDDEN_DIM, OUT_FEATURES)

    # LayerNorm defaults: weight = 1, bias = 0
    for name in ("g1", "g2", "gk", "gv"):
        params[name] = jnp.ones((1, HIDDEN_DIM), jnp.float32)
    for name in ("be1", "be2", "bek", "bev"):
        params[name] = jnp.zeros((1, HIDDEN_DIM), jnp.float32)
    return params


@functools.partial(jax.jit, static_argnames=("tile_b",))
def token_generator_forward(z, params, tile_b=32):
    """z: (B, LATENT_DIM) float32 -> (keys (B,T,IN), values (B,T,OUT)).

    tile_b = batches per grid step (tile_b * 32 rows per step). Default 32
    gives 1024-row matmul tiles.  tile_b is clamped/aligned and the batch is
    zero-padded so that ANY batch size runs; keep the grid >= 2 * num_cores if
    you want both v7x TensorCores busy (dimension_semantics=("parallel",)).
    """
    B = z.shape[0]
    tb = max(1, min(tile_b, B))
    if tb < B:
        # When the grid has more than one step the z block's sublane dim must
        # be a multiple of 8.
        tb = max(8, (tb // 8) * 8)
    pad = (-B) % tb
    Bp = B + pad

    z = z.astype(jnp.float32)
    if pad:
        z = jnp.concatenate([z, jnp.zeros((pad, LATENT_DIM), jnp.float32)], axis=0)

    pos_enc = make_pos_encodings()                                  # (T, 2F)

    # Split w1: x @ w1 == z @ w1_z + pos_enc @ w1_pos.  Fold b1 into the
    # constant positional term so it never has to be DMA'd separately.
    w1 = params["w1"]
    w1_z = w1[:LATENT_DIM, :]                                       # (64, 128)
    w1_pos = w1[LATENT_DIM:, :]                                     # (64, 128)
    pos_w1b = pos_enc @ w1_pos + params["b1"]                       # (T, 128)

    # Pack all (128, *) second-stage weights into one lane-aligned slab:
    # [w2 | wk1:wv1 fused | wk2 | wv2]  ->  (128, 640).
    wbig = jnp.concatenate(
        [params["w2"], params["wk1"], params["wv1"], params["wk2"], params["wv2"]],
        axis=1)                                                     # (128, 640)

    # Pack the 13 small (1,128) vectors into one (16,128) array.
    vecs = jnp.concatenate(
        [params["g1"], params["be1"],
         params["b2"], params["g2"], params["be2"],
         params["bk1"], params["gk"], params["bek"], params["bk2"],
         params["bv1"], params["gv"], params["bev"], params["bv2"],
         jnp.zeros((_VEC_ROWS - 13, HIDDEN_DIM), jnp.float32)],
        axis=0)                                                     # (16, 128)

    rows = Bp * NUM_TOKENS
    grid = (Bp // tb,)

    def full_spec(arr):
        return pl.BlockSpec(arr.shape, lambda i: (0, 0))

    z_spec = pl.BlockSpec((tb, LATENT_DIM), lambda i: (i, 0))
    out_k_spec = pl.BlockSpec((tb * NUM_TOKENS, IN_FEATURES), lambda i: (i, 0))
    out_v_spec = pl.BlockSpec((tb * NUM_TOKENS, OUT_FEATURES), lambda i: (i, 0))

    p_args = [pos_w1b, w1_z, wbig, vecs]
    p_specs = [full_spec(a) for a in p_args]

    keys_out, vals_out = pl.pallas_call(
        token_generator_kernel,
        out_shape=(
            jax.ShapeDtypeStruct((rows, IN_FEATURES), jnp.float32),
            jax.ShapeDtypeStruct((rows, OUT_FEATURES), jnp.float32),
        ),
        grid_spec=pltpu.PrefetchScalarGridSpec(
            num_scalar_prefetch=0,
            grid=grid,
            in_specs=[z_spec] + p_specs,
            out_specs=[out_k_spec, out_v_spec],
        ),
        compiler_params=pltpu.CompilerParams(
            dimension_semantics=("parallel",)),
    )(z, *p_args)

    keys = keys_out.reshape(Bp, NUM_TOKENS, IN_FEATURES)
    values = vals_out.reshape(Bp, NUM_TOKENS, OUT_FEATURES)
    if pad:
        keys = keys[:B]
        values = values[:B]
    return keys, values


def reference_forward(z, params):
    """Plain-JAX reference mirroring the PyTorch module exactly (unsplit w1,
    unfused key/value nets, two-pass LayerNorm, sqrt+divide normalize)."""
    B = z.shape[0]
    pos_enc = make_pos_encodings()
    z_exp = jnp.broadcast_to(z[:, None, :], (B, NUM_TOKENS, LATENT_DIM))
    pos_exp = jnp.broadcast_to(pos_enc[None], (B, NUM_TOKENS, 2 * POS_FREQS))
    x = jnp.concatenate([z_exp, pos_exp], axis=-1)

    def ln(h, g, b):
        mean = jnp.mean(h, axis=-1, keepdims=True)
        var = jnp.mean((h - mean) ** 2, axis=-1, keepdims=True)
        return (h - mean) / jnp.sqrt(var + _LN_EPS) * g + b

    def gelu(h):
        return 0.5 * h * (1.0 + lax.erf(h * _INV_SQRT2))

    def l2(h):
        n = jnp.sqrt(jnp.sum(h * h, axis=-1, keepdims=True))
        return h / jnp.maximum(n, _NORM_EPS)

    h = gelu(ln(x @ params["w1"] + params["b1"], params["g1"], params["be1"]))
    h = gelu(ln(h @ params["w2"] + params["b2"], params["g2"], params["be2"]))
    k = gelu(ln(h @ params["wk1"] + params["bk1"], params["gk"], params["bek"]))
    k = k @ params["wk2"] + params["bk2"]
    v = gelu(ln(h @ params["wv1"] + params["bv1"], params["gv"], params["bev"]))
    v = v @ params["wv2"] + params["bv2"]
    return l2(k), l2(v)


if __name__ == "__main__":
    key = jax.random.PRNGKey(0)
    kz, kp = jax.random.split(key)
    B = 2
    z = jax.random.normal(kz, (B, LATENT_DIM), jnp.float32)
    params = init_params(kp)

    keys, values = token_generator_forward(z, params)
    keys, values = jax.block_until_ready((keys, values))

    ref_k, ref_v = reference_forward(z, params)
    assert keys.shape == (B, NUM_TOKENS, IN_FEATURES)
    assert values.shape == (B, NUM_TOKENS, OUT_FEATURES)
    # Tolerance 2e-5: kernel restructures the math slightly (split w1,
    # one-pass LN variance, fused kv matmul), all f32.
    assert jnp.allclose(keys, ref_k, atol=2e-5, rtol=2e-5), "keys mismatch"
    assert jnp.allclose(values, ref_v, atol=2e-5, rtol=2e-5), "values mismatch"

    print("KERNEL_OK")
</pallas_src>

<mosaic_0001>
module attributes {stable_mosaic.version = 11 : i64} {
  func.func @token_generator_kernel(%arg0: i32, %arg1: memref<2x64xf32, #tpu.memory_space<vmem>>, %arg2: memref<32x128xf32, #tpu.memory_space<vmem>>, %arg3: memref<64x128xf32, #tpu.memory_space<vmem>>, %arg4: memref<128x640xf32, #tpu.memory_space<vmem>>, %arg5: memref<16x128xf32, #tpu.memory_space<vmem>>, %arg6: memref<64x128xf32, #tpu.memory_space<vmem>>, %arg7: memref<64x128xf32, #tpu.memory_space<vmem>>) attributes {dimension_semantics = [#tpu.dimension_semantics<parallel>], iteration_bounds = array<i64: 1>, scalar_prefetch = 0 : i64, scratch_operands = 0 : i64, tpu.core_type = #tpu.core_type<tc>, window_params = [{transform_indices = @transform_0, window_bounds = array<i64: 2, 64>}, {pipeline_mode = #tpu.pipeline_mode<synchronous>, transform_indices = @transform_1, window_bounds = array<i64: 32, 128>}, {pipeline_mode = #tpu.pipeline_mode<synchronous>, transform_indices = @transform_2, window_bounds = array<i64: 64, 128>}, {pipeline_mode = #tpu.pipeline_mode<synchronous>, transform_indices = @transform_3, window_bounds = array<i64: 128, 640>}, {pipeline_mode = #tpu.pipeline_mode<synchronous>, transform_indices = @transform_4, window_bounds = array<i64: 16, 128>}, {transform_indices = @transform_5, window_bounds = array<i64: 64, 128>}, {transform_indices = @transform_6, window_bounds = array<i64: 64, 128>}]} {
    %c0 = arith.constant 0 : index
    %c0_0 = arith.constant 0 : index
    %0 = vector.load %arg5[%c0, %c0_0] : memref<16x128xf32, #tpu.memory_space<vmem>>, vector<16x128xf32>
    %c0_1 = arith.constant 0 : index
    %c0_2 = arith.constant 0 : index
    %1 = vector.load %arg1[%c0_1, %c0_2] : memref<2x64xf32, #tpu.memory_space<vmem>>, vector<2x64xf32>
    %c0_3 = arith.constant 0 : index
    %c0_4 = arith.constant 0 : index
    %2 = vector.load %arg3[%c0_3, %c0_4] : memref<64x128xf32, #tpu.memory_space<vmem>>, vector<64x128xf32>
    %cst = arith.constant dense<0.000000e+00> : vector<2x128xf32>
    %3 = tpu.matmul %1, %2, %cst {dimension_numbers = #tpu.dot_dimension_numbers<[1], [0], [0], [1], [0, 0, 1, 1], [], []>} : vector<2x64xf32>, vector<64x128xf32>, vector<2x128xf32> -> vector<2x128xf32>
    %4 = vector.shape_cast %3 : vector<2x128xf32> to vector<2x1x128xf32>
    %c0_5 = arith.constant 0 : index
    %c0_6 = arith.constant 0 : index
    %5 = vector.load %arg2[%c0_5, %c0_6] : memref<32x128xf32, #tpu.memory_space<vmem>>, vector<32x128xf32>
    %6 = vector.shape_cast %5 : vector<32x128xf32> to vector<1x32x128xf32>
    %7 = vector.broadcast %4 : vector<2x1x128xf32> to vector<2x32x128xf32>
    %8 = vector.broadcast %6 : vector<1x32x128xf32> to vector<2x32x128xf32>
    %9 = arith.addf %7, %8 : vector<2x32x128xf32>
    %10 = vector.shape_cast %9 : vector<2x32x128xf32> to vector<64x128xf32>
    %11 = vector.extract_strided_slice %0 {offsets = [0, 0], sizes = [1, 128], strides = [1, 1]} : vector<16x128xf32> to vector<1x128xf32>
    %12 = vector.extract_strided_slice %0 {offsets = [1, 0], sizes = [1, 128], strides = [1, 1]} : vector<16x128xf32> to vector<1x128xf32>
    %cst_7 = arith.constant dense<0.000000e+00> : vector<64xf32>
    %13 = vector.multi_reduction <add>, %10, %cst_7 [1] : vector<64x128xf32> to vector<64xf32>
    %14 = vector.shape_cast %13 : vector<64xf32> to vector<64x1xf32>
    %cst_8 = arith.constant 1.280000e+02 : f32
    %15 = vector.broadcast %cst_8 : f32 to vector<64x1xf32>
    %16 = arith.divf %14, %15 : vector<64x1xf32>
    %17 = arith.mulf %10, %10 : vector<64x128xf32>
    %cst_9 = arith.constant dense<0.000000e+00> : vector<64xf32>
    %18 = vector.multi_reduction <add>, %17, %cst_9 [1] : vector<64x128xf32> to vector<64xf32>
    %19 = vector.shape_cast %18 : vector<64xf32> to vector<64x1xf32>
    %cst_10 = arith.constant 1.280000e+02 : f32
    %20 = vector.broadcast %cst_10 : f32 to vector<64x1xf32>
    %21 = arith.divf %19, %20 : vector<64x1xf32>
    %22 = arith.mulf %16, %16 : vector<64x1xf32>
    %23 = arith.subf %21, %22 : vector<64x1xf32>
    %24 = vector.broadcast %16 : vector<64x1xf32> to vector<64x128xf32>
    %25 = arith.subf %10, %24 : vector<64x128xf32>
    %cst_11 = arith.constant 9.99999974E-6 : f32
    %26 = vector.broadcast %cst_11 : f32 to vector<64x1xf32>
    %27 = arith.addf %23, %26 : vector<64x1xf32>
    %28 = math.rsqrt %27 : vector<64x1xf32>
    %29 = vector.broadcast %28 : vector<64x1xf32> to vector<64x128xf32>
    %30 = arith.mulf %25, %29 : vector<64x128xf32>
    %31 = vector.broadcast %11 : vector<1x128xf32> to vector<64x128xf32>
    %32 = arith.mulf %30, %31 : vector<64x128xf32>
    %33 = vector.broadcast %12 : vector<1x128xf32> to vector<64x128xf32>
    %34 = arith.addf %32, %33 : vector<64x128xf32>
    %cst_12 = arith.constant 5.000000e-01 : f32
    %35 = vector.broadcast %cst_12 : f32 to vector<64x128xf32>
    %36 = arith.mulf %35, %34 : vector<64x128xf32>
    %cst_13 = arith.constant 0.707106769 : f32
    %37 = vector.broadcast %cst_13 : f32 to vector<64x128xf32>
    %38 = arith.mulf %34, %37 : vector<64x128xf32>
    %39 = math.erf %38 : vector<64x128xf32>
    %cst_14 = arith.constant 1.000000e+00 : f32
    %40 = vector.broadcast %cst_14 : f32 to vector<64x128xf32>
    %41 = arith.addf %40, %39 : vector<64x128xf32>
    %42 = arith.mulf %36, %41 : vector<64x128xf32>
    %c0_15 = arith.constant 0 : index
    %c0_16 = arith.constant 0 : index
    %43 = vector.load %arg4[%c0_15, %c0_16] : memref<128x640xf32, #tpu.memory_space<vmem>>, vector<128x128xf32>
    %cst_17 = arith.constant dense<0.000000e+00> : vector<64x128xf32>
    %44 = tpu.matmul %42, %43, %cst_17 {dimension_numbers = #tpu.dot_dimension_numbers<[1], [0], [0], [1], [0, 0, 1, 1], [], []>} : vector<64x128xf32>, vector<128x128xf32>, vector<64x128xf32> -> vector<64x128xf32>
    %45 = vector.extract_strided_slice %0 {offsets = [2, 0], sizes = [1, 128], strides = [1, 1]} : vector<16x128xf32> to vector<1x128xf32>
    %46 = vector.broadcast %45 : vector<1x128xf32> to vector<64x128xf32>
    %47 = arith.addf %44, %46 : vector<64x128xf32>
    %48 = vector.extract_strided_slice %0 {offsets = [3, 0], sizes = [1, 128], strides = [1, 1]} : vector<16x128xf32> to vector<1x128xf32>
    %49 = vector.extract_strided_slice %0 {offsets = [4, 0], sizes = [1, 128], strides = [1, 1]} : vector<16x128xf32> to vector<1x128xf32>
    %cst_18 = arith.constant dense<0.000000e+00> : vector<64xf32>
    %50 = vector.multi_reduction <add>, %47, %cst_18 [1] : vector<64x128xf32> to vector<64xf32>
    %51 = vector.shape_cast %50 : vector<64xf32> to vector<64x1xf32>
    %cst_19 = arith.constant 1.280000e+02 : f32
    %52 = vector.broadcast %cst_19 : f32 to vector<64x1xf32>
    %53 = arith.divf %51, %52 : vector<64x1xf32>
    %54 = arith.mulf %47, %47 : vector<64x128xf32>
    %cst_20 = arith.constant dense<0.000000e+00> : vector<64xf32>
    %55 = vector.multi_reduction <add>, %54, %cst_20 [1] : vector<64x128xf32> to vector<64xf32>
    %56 = vector.shape_cast %55 : vector<64xf32> to vector<64x1xf32>
    %cst_21 = arith.constant 1.280000e+02 : f32
    %57 = vector.broadcast %cst_21 : f32 to vector<64x1xf32>
    %58 = arith.divf %56, %57 : vector<64x1xf32>
    %59 = arith.mulf %53, %53 : vector<64x1xf32>
    %60 = arith.subf %58, %59 : vector<64x1xf32>
    %61 = vector.broadcast %53 : vector<64x1xf32> to vector<64x128xf32>
    %62 = arith.subf %47, %61 : vector<64x128xf32>
    %cst_22 = arith.constant 9.99999974E-6 : f32
    %63 = vector.broadcast %cst_22 : f32 to vector<64x1xf32>
    %64 = arith.addf %60, %63 : vector<64x1xf32>
    %65 = math.rsqrt %64 : vector<64x1xf32>
    %66 = vector.broadcast %65 : vector<64x1xf32> to vector<64x128xf32>
    %67 = arith.mulf %62, %66 : vector<64x128xf32>
    %68 = vector.broadcast %48 : vector<1x128xf32> to vector<64x128xf32>
    %69 = arith.mulf %67, %68 : vector<64x128xf32>
    %70 = vector.broadcast %49 : vector<1x128xf32> to vector<64x128xf32>
    %71 = arith.addf %69, %70 : vector<64x128xf32>
    %cst_23 = arith.constant 5.000000e-01 : f32
    %72 = vector.broadcast %cst_23 : f32 to vector<64x128xf32>
    %73 = arith.mulf %72, %71 : vector<64x128xf32>
    %cst_24 = arith.constant 0.707106769 : f32
    %74 = vector.broadcast %cst_24 : f32 to vector<64x128xf32>
    %75 = arith.mulf %71, %74 : vector<64x128xf32>
    %76 = math.erf %75 : vector<64x128xf32>
    %cst_25 = arith.constant 1.000000e+00 : f32
    %77 = vector.broadcast %cst_25 : f32 to vector<64x128xf32>
    %78 = arith.addf %77, %76 : vector<64x128xf32>
    %79 = arith.mulf %73, %78 : vector<64x128xf32>
    %c0_26 = arith.constant 0 : index
    %c128 = arith.constant 128 : index
    %80 = vector.load %arg4[%c0_26, %c128] : memref<128x640xf32, #tpu.memory_space<vmem>>, vector<128x256xf32>
    %cst_27 = arith.constant dense<0.000000e+00> : vector<64x256xf32>
    %81 = tpu.matmul %79, %80, %cst_27 {dimension_numbers = #tpu.dot_dimension_numbers<[1], [0], [0], [1], [0, 0, 1, 1], [], []>} : vector<64x128xf32>, vector<128x256xf32>, vector<64x256xf32> -> vector<64x256xf32>
    %82 = vector.extract_strided_slice %81 {offsets = [0, 0], sizes = [64, 128], strides = [1, 1]} : vector<64x256xf32> to vector<64x128xf32>
    %83 = vector.extract_strided_slice %0 {offsets = [5, 0], sizes = [1, 128], strides = [1, 1]} : vector<16x128xf32> to vector<1x128xf32>
    %84 = vector.broadcast %83 : vector<1x128xf32> to vector<64x128xf32>
    %85 = arith.addf %82, %84 : vector<64x128xf32>
    %86 = vector.extract_strided_slice %0 {offsets = [6, 0], sizes = [1, 128], strides = [1, 1]} : vector<16x128xf32> to vector<1x128xf32>
    %87 = vector.extract_strided_slice %0 {offsets = [7, 0], sizes = [1, 128], strides = [1, 1]} : vector<16x128xf32> to vector<1x128xf32>
    %cst_28 = arith.constant dense<0.000000e+00> : vector<64xf32>
    %88 = vector.multi_reduction <add>, %85, %cst_28 [1] : vector<64x128xf32> to vector<64xf32>
    %89 = vector.shape_cast %88 : vector<64xf32> to vector<64x1xf32>
    %cst_29 = arith.constant 1.280000e+02 : f32
    %90 = vector.broadcast %cst_29 : f32 to vector<64x1xf32>
    %91 = arith.divf %89, %90 : vector<64x1xf32>
    %92 = arith.mulf %85, %85 : vector<64x128xf32>
    %cst_30 = arith.constant dense<0.000000e+00> : vector<64xf32>
    %93 = vector.multi_reduction <add>, %92, %cst_30 [1] : vector<64x128xf32> to vector<64xf32>
    %94 = vector.shape_cast %93 : vector<64xf32> to vector<64x1xf32>
    %cst_31 = arith.constant 1.280000e+02 : f32
    %95 = vector.broadcast %cst_31 : f32 to vector<64x1xf32>
    %96 = arith.divf %94, %95 : vector<64x1xf32>
    %97 = arith.mulf %91, %91 : vector<64x1xf32>
    %98 = arith.subf %96, %97 : vector<64x1xf32>
    %99 = vector.broadcast %91 : vector<64x1xf32> to vector<64x128xf32>
    %100 = arith.subf %85, %99 : vector<64x128xf32>
    %cst_32 = arith.constant 9.99999974E-6 : f32
    %101 = vector.broadcast %cst_32 : f32 to vector<64x1xf32>
    %102 = arith.addf %98, %101 : vector<64x1xf32>
    %103 = math.rsqrt %102 : vector<64x1xf32>
    %104 = vector.broadcast %103 : vector<64x1xf32> to vector<64x128xf32>
    %105 = arith.mulf %100, %104 : vector<64x128xf32>
    %106 = vector.broadcast %86 : vector<1x128xf32> to vector<64x128xf32>
    %107 = arith.mulf %105, %106 : vector<64x128xf32>
    %108 = vector.broadcast %87 : vector<1x128xf32> to vector<64x128xf32>
    %109 = arith.addf %107, %108 : vector<64x128xf32>
    %cst_33 = arith.constant 5.000000e-01 : f32
    %110 = vector.broadcast %cst_33 : f32 to vector<64x128xf32>
    %111 = arith.mulf %110, %109 : vector<64x128xf32>
    %cst_34 = arith.constant 0.707106769 : f32
    %112 = vector.broadcast %cst_34 : f32 to vector<64x128xf32>
    %113 = arith.mulf %109, %112 : vector<64x128xf32>
    %114 = math.erf %113 : vector<64x128xf32>
    %cst_35 = arith.constant 1.000000e+00 : f32
    %115 = vector.broadcast %cst_35 : f32 to vector<64x128xf32>
    %116 = arith.addf %115, %114 : vector<64x128xf32>
    %117 = arith.mulf %111, %116 : vector<64x128xf32>
    %118 = vector.extract_strided_slice %81 {offsets = [0, 128], sizes = [64, 128], strides = [1, 1]} : vector<64x256xf32> to vector<64x128xf32>
    %119 = vector.extract_strided_slice %0 {offsets = [9, 0], sizes = [1, 128], strides = [1, 1]} : vector<16x128xf32> to vector<1x128xf32>
    %120 = vector.broadcast %119 : vector<1x128xf32> to vector<64x128xf32>
    %121 = arith.addf %118, %120 : vector<64x128xf32>
    %122 = vector.extract_strided_slice %0 {offsets = [10, 0], sizes = [1, 128], strides = [1, 1]} : vector<16x128xf32> to vector<1x128xf32>
    %123 = vector.extract_strided_slice %0 {offsets = [11, 0], sizes = [1, 128], strides = [1, 1]} : vector<16x128xf32> to vector<1x128xf32>
    %cst_36 = arith.constant dense<0.000000e+00> : vector<64xf32>
    %124 = vector.multi_reduction <add>, %121, %cst_36 [1] : vector<64x128xf32> to vector<64xf32>
    %125 = vector.shape_cast %124 : vector<64xf32> to vector<64x1xf32>
    %cst_37 = arith.constant 1.280000e+02 : f32
    %126 = vector.broadcast %cst_37 : f32 to vector<64x1xf32>
    %127 = arith.divf %125, %126 : vector<64x1xf32>
    %128 = arith.mulf %121, %121 : vector<64x128xf32>
    %cst_38 = arith.constant dense<0.000000e+00> : vector<64xf32>
    %129 = vector.multi_reduction <add>, %128, %cst_38 [1] : vector<64x128xf32> to vector<64xf32>
    %130 = vector.shape_cast %129 : vector<64xf32> to vector<64x1xf32>
    %cst_39 = arith.constant 1.280000e+02 : f32
    %131 = vector.broadcast %cst_39 : f32 to vector<64x1xf32>
    %132 = arith.divf %130, %131 : vector<64x1xf32>
    %133 = arith.mulf %127, %127 : vector<64x1xf32>
    %134 = arith.subf %132, %133 : vector<64x1xf32>
    %135 = vector.broadcast %127 : vector<64x1xf32> to vector<64x128xf32>
    %136 = arith.subf %121, %135 : vector<64x128xf32>
    %cst_40 = arith.constant 9.99999974E-6 : f32
    %137 = vector.broadcast %cst_40 : f32 to vector<64x1xf32>
    %138 = arith.addf %134, %137 : vector<64x1xf32>
    %139 = math.rsqrt %138 : vector<64x1xf32>
    %140 = vector.broadcast %139 : vector<64x1xf32> to vector<64x128xf32>
    %141 = arith.mulf %136, %140 : vector<64x128xf32>
    %142 = vector.broadcast %122 : vector<1x128xf32> to vector<64x128xf32>
    %143 = arith.mulf %141, %142 : vector<64x128xf32>
    %144 = vector.broadcast %123 : vector<1x128xf32> to vector<64x128xf32>
    %145 = arith.addf %143, %144 : vector<64x128xf32>
    %cst_41 = arith.constant 5.000000e-01 : f32
    %146 = vector.broadcast %cst_41 : f32 to vector<64x128xf32>
    %147 = arith.mulf %146, %145 : vector<64x128xf32>
    %cst_42 = arith.constant 0.707106769 : f32
    %148 = vector.broadcast %cst_42 : f32 to vector<64x128xf32>
    %149 = arith.mulf %145, %148 : vector<64x128xf32>
    %150 = math.erf %149 : vector<64x128xf32>
    %cst_43 = arith.constant 1.000000e+00 : f32
    %151 = vector.broadcast %cst_43 : f32 to vector<64x128xf32>
    %152 = arith.addf %151, %150 : vector<64x128xf32>
    %153 = arith.mulf %147, %152 : vector<64x128xf32>
    %c0_44 = arith.constant 0 : index
    %c384 = arith.constant 384 : index
    %154 = vector.load %arg4[%c0_44, %c384] : memref<128x640xf32, #tpu.memory_space<vmem>>, vector<128x128xf32>
    %cst_45 = arith.constant dense<0.000000e+00> : vector<64x128xf32>
    %155 = tpu.matmul %117, %154, %cst_45 {dimension_numbers = #tpu.dot_dimension_numbers<[1], [0], [0], [1], [0, 0, 1, 1], [], []>} : vector<64x128xf32>, vector<128x128xf32>, vector<64x128xf32> -> vector<64x128xf32>
    %156 = vector.extract_strided_slice %0 {offsets = [8, 0], sizes = [1, 128], strides = [1, 1]} : vector<16x128xf32> to vector<1x128xf32>
    %157 = vector.broadcast %156 : vector<1x128xf32> to vector<64x128xf32>
    %158 = arith.addf %155, %157 : vector<64x128xf32>
    %c0_46 = arith.constant 0 : index
    %c512 = arith.constant 512 : index
    %159 = vector.load %arg4[%c0_46, %c512] : memref<128x640xf32, #tpu.memory_space<vmem>>, vector<128x128xf32>
    %cst_47 = arith.constant dense<0.000000e+00> : vector<64x128xf32>
    %160 = tpu.matmul %153, %159, %cst_47 {dimension_numbers = #tpu.dot_dimension_numbers<[1], [0], [0], [1], [0, 0, 1, 1], [], []>} : vector<64x128xf32>, vector<128x128xf32>, vector<64x128xf32> -> vector<64x128xf32>
    %161 = vector.extract_strided_slice %0 {offsets = [12, 0], sizes = [1, 128], strides = [1, 1]} : vector<16x128xf32> to vector<1x128xf32>
    %162 = vector.broadcast %161 : vector<1x128xf32> to vector<64x128xf32>
    %163 = arith.addf %160, %162 : vector<64x128xf32>
    %164 = arith.mulf %158, %158 : vector<64x128xf32>
    %cst_48 = arith.constant dense<0.000000e+00> : vector<64xf32>
    %165 = vector.multi_reduction <add>, %164, %cst_48 [1] : vector<64x128xf32> to vector<64xf32>
    %166 = vector.shape_cast %165 : vector<64xf32> to vector<64x1xf32>
    %cst_49 = arith.constant 1.000000e-24 : f32
    %167 = vector.broadcast %cst_49 : f32 to vector<64x1xf32>
    %168 = arith.maximumf %166, %167 : vector<64x1xf32>
    %169 = math.rsqrt %168 : vector<64x1xf32>
    %170 = vector.broadcast %169 : vector<64x1xf32> to vector<64x128xf32>
    %171 = arith.mulf %158, %170 : vector<64x128xf32>
    %c0_50 = arith.constant 0 : index
    %c0_51 = arith.constant 0 : index
    %172 = vector.load %arg6[%c0_50, %c0_51] : memref<64x128xf32, #tpu.memory_space<vmem>>, vector<64x128xf32>
    tpu.vector_store %arg6[%c0_50, %c0_51], %171 {strides = array<i32>} : memref<64x128xf32, #tpu.memory_space<vmem>>, vector<64x128xf32>,
    %173 = arith.mulf %163, %163 : vector<64x128xf32>
    %cst_52 = arith.constant dense<0.000000e+00> : vector<64xf32>
    %174 = vector.multi_reduction <add>, %173, %cst_52 [1] : vector<64x128xf32> to vector<64xf32>
    %175 = vector.shape_cast %174 : vector<64xf32> to vector<64x1xf32>
    %cst_53 = arith.constant 1.000000e-24 : f32
    %176 = vector.broadcast %cst_53 : f32 to vector<64x1xf32>
    %177 = arith.maximumf %175, %176 : vector<64x1xf32>
    %178 = math.rsqrt %177 : vector<64x1xf32>
    %179 = vector.broadcast %178 : vector<64x1xf32> to vector<64x128xf32>
    %180 = arith.mulf %163, %179 : vector<64x128xf32>
    %c0_54 = arith.constant 0 : index
    %c0_55 = arith.constant 0 : index
    %181 = vector.load %arg7[%c0_54, %c0_55] : memref<64x128xf32, #tpu.memory_space<vmem>>, vector<64x128xf32>
    tpu.vector_store %arg7[%c0_54, %c0_55], %180 {strides = array<i32>} : memref<64x128xf32, #tpu.memory_space<vmem>>, vector<64x128xf32>,
    return
  }
  func.func @transform_0(%arg0: i32) -> (i32, i32) {
    %c0_i32 = arith.constant 0 : i32
    %c0_i32_0 = arith.constant 0 : i32
    return %arg0, %c0_i32 : i32, i32
  }
  func.func @transform_1(%arg0: i32) -> (i32, i32) {
    %c0_i32 = arith.constant 0 : i32
    %c0_i32_0 = arith.constant 0 : i32
    %c0_i32_1 = arith.constant 0 : i32
    return %c0_i32, %c0_i32_0 : i32, i32
  }
  func.func @transform_2(%arg0: i32) -> (i32, i32) {
    %c0_i32 = arith.constant 0 : i32
    %c0_i32_0 = arith.constant 0 : i32
    %c0_i32_1 = arith.constant 0 : i32
    return %c0_i32, %c0_i32_0 : i32, i32
  }
  func.func @transform_3(%arg0: i32) -> (i32, i32) {
    %c0_i32 = arith.constant 0 : i32
    %c0_i32_0 = arith.constant 0 : i32
    %c0_i32_1 = arith.constant 0 : i32
    return %c0_i32, %c0_i32_0 : i32, i32
  }
  func.func @transform_4(%arg0: i32) -> (i32, i32) {
    %c0_i32 = arith.constant 0 : i32
    %c0_i32_0 = arith.constant 0 : i32
    %c0_i32_1 = arith.constant 0 : i32
    return %c0_i32, %c0_i32_0 : i32, i32
  }
  func.func @transform_5(%arg0: i32) -> (i32, i32) {
    %c0_i32 = arith.constant 0 : i32
    %c0_i32_0 = arith.constant 0 : i32
    return %arg0, %c0_i32 : i32, i32
  }
  func.func @transform_6(%arg0: i32) -> (i32, i32) {
    %c0_i32 = arith.constant 0 : i32
    %c0_i32_0 = arith.constant 0 : i32
    return %arg0, %c0_i32 : i32, i32
  }
}

</mosaic_0001>

<llo_original>
// kernel: token_generator_forward.1
$region0: #{token_generator_forward.1}
  #allocation0 [shape = 'u32[]', space=smem, size = 0x4, offset = 0x4, fixed_abs, tag = 'smem constant byte address 0x4 - core index']
  #allocation1 [shape = 'u32[144,128]{1,0:T(1,128)}', space=vmem, size = 0x12000, scoped, tag = 'internal scratch']
  %s0 = inlined_call_operand.vmem [shape: f32[2,64], index: 0, kind: input, shape index: {}]
  %s1 = inlined_call_operand.vmem [shape: f32[32,128], index: 1, kind: input, shape index: {}]
  %s2 = inlined_call_operand.vmem [shape: f32[64,128], index: 2, kind: input, shape index: {}]
  %s3 = inlined_call_operand.vmem [shape: f32[128,640], index: 3, kind: input, shape index: {}]
  %s4 = inlined_call_operand.vmem [shape: f32[16,128], index: 4, kind: input, shape index: {}]
  %s5 = inlined_call_operand.hbm [shape: f32[64,128], index: 5, kind: output, shape index: {0}]
  %s6 = inlined_call_operand.hbm [shape: f32[64,128], index: 6, kind: output, shape index: {1}]
  %7 = xla_tuple %s5, %s6
  %s8 = sld [smem:[#allocation0]]
  $region38: #{token_generator_forward.1} parent=0
    _
  %s10 = ssub.s32 1, %s8
  %s11 = scalar_select 0, %s10, %s8
  $region1: #{token_generator_forward.1} parent=0
    #allocation2 [shape = 'u8[32768]{0}', space=vmem, size = 0x8000, scoped, tag = 'output window, operand 0, single buffered']
    #allocation3 [shape = 's32[1]{0}', space=sflag, size = 0x4, scoped, tag = 'scoped memory for token_generator_forward.1']
    #allocation4 [shape = 'u8[32768]{0}', space=vmem, size = 0x8000, scoped, tag = 'output window, operand 1, single buffered']
    #allocation5 [shape = 's32[1]{0}', space=sflag, size = 0x4, scoped, tag = 'scoped memory for token_generator_forward.1']
    %12 = vsyncpa [#allocation3], 0
    %13 = vsyncpa [#allocation5], 0
    // Predicated region
    $region2: #{token_generator_forward.1} parent=1 // pred_check
      _
    $region3: #{token_generator_forward.1} parent=1 // pred_check_branch
      %15 = sbr.rel (0) target = $region5
    $region4: #{token_generator_forward.1} parent=1 // pred_region
      _
    $region5: #{token_generator_forward.1} parent=1 // pred_fallthru
      _
    // Predicated region
    $region6: #{token_generator_forward.1} parent=1 // pred_check
      _
    $region7: #{token_generator_forward.1} parent=1 // pred_check_branch
      %17 = sbr.rel (0) target = $region9
    $region8: #{token_generator_forward.1} parent=1 // pred_region
      _
    $region9: #{token_generator_forward.1} parent=1 // pred_fallthru
      _
    // Predicated region
    $region10: #{token_generator_forward.1} parent=1 // pred_check
      _
    $region11: #{token_generator_forward.1} parent=1 // pred_check_branch
      %19 = sbr.rel (0) target = $region13
    $region12: #{token_generator_forward.1} parent=1 // pred_region
      _
    $region13: #{token_generator_forward.1} parent=1 // pred_fallthru
      _
    // Predicated region
    $region14: #{token_generator_forward.1} parent=1 // pred_check
      _
    $region15: #{token_generator_forward.1} parent=1 // pred_check_branch
      %21 = sbr.rel (0) target = $region17
    $region16: #{token_generator_forward.1} parent=1 // pred_region
      _
    $region17: #{token_generator_forward.1} parent=1 // pred_fallthru
      _
    // Predicated region
    $region18: #{token_generator_forward.1} parent=1 // pred_check
      _
    $region19: #{token_generator_forward.1} parent=1 // pred_check_branch
      %23 = sbr.rel (0) target = $region21
    $region20: #{token_generator_forward.1} parent=1 // pred_region
      _
    $region21: #{token_generator_forward.1} parent=1 // pred_fallthru
      _
    %v24 = vld [vmem:[%s4] sm:$0xff]
    %v25 = vld [vmem:[%s4 + $0x8] sm:$0xff]
    %v26 = vld [vmem:[%s0] sm:$0x3]
    %v27 = vld [vmem:[%s2] sm:$0xff]
    %v28 = vld [vmem:[%s2 + $0x8] sm:$0xff]
    %v29 = vld [vmem:[%s2 + $0x10] sm:$0xff]
    %v30 = vld [vmem:[%s2 + $0x18] sm:$0xff]
    %v31 = vld [vmem:[%s2 + $0x20] sm:$0xff]
    %v32 = vld [vmem:[%s2 + $0x28] sm:$0xff]
    %v33 = vld [vmem:[%s2 + $0x30] sm:$0xff]
    %v34 = vld [vmem:[%s2 + $0x38] sm:$0xff]
    %vm35 = vcmask 523264
    %v37 = vsel %vm35, %v26, 0
    %39 = vmatprep.subr.mxu0 0.0
    %40 = vmatpush1.msra.mxu0 %v27
    %41 = vmatprep.subr.mxu0 0.0
    %42 = vmatpush1.msra.mxu0 %v28
    %43 = vmatprep.subr.mxu0 0.0
    %44 = vmatpush1.msra.mxu0 %v29
    %45 = vmatprep.subr.mxu0 0.0
    %46 = vmatpush1.msra.mxu0 %v30
    %47 = vmatprep.subr.mxu0 0.0
    %48 = vmatpush1.msra.mxu0 %v31
    %49 = vmatprep.subr.mxu0 0.0
    %50 = vmatpush1.msra.mxu0 %v32
    %51 = vmatprep.subr.mxu0 0.0
    %52 = vmatpush1.msra.mxu0 %v33
    %53 = vmatprep.subr.mxu0 0.0
    %54 = vmatpush1.msra.mxu0 %v34
    %55 = vmatprep.subr.mxu0 0.0
    %56 = vmatpush1.msra.mxu0 0.0
    %57 = vmatprep.subr.mxu0 0.0
    %58 = vmatpush1.msra.mxu0 0.0
    %59 = vmatprep.subr.mxu0 0.0
    %60 = vmatpush1.msra.mxu0 0.0
    %61 = vmatprep.subr.mxu0 0.0
    %62 = vmatpush1.msra.mxu0 0.0
    %63 = vmatprep.subr.mxu0 0.0
    %64 = vmatpush1.msra.mxu0 0.0
    %65 = vmatprep.subr.mxu0 0.0
    %66 = vmatpush1.msra.mxu0 0.0
    %67 = vmatprep.subr.mxu0 0.0
    %68 = vmatpush1.msra.mxu0 0.0
    %69 = vmatprep.subr.mxu0 0.0
    %70 = vmatpush1.msra.mxu0 0.0
    %71 = vmatprep.subr.mxu0 0.0
    %72 = vmatpush1.msra.mxu0 0.0
    %73 = vmatprep.subr.mxu0 0.0
    %74 = vmatpush1.msra.mxu0 0.0
    %75 = vmatprep.subr.mxu0 0.0
    %76 = vmatpush1.msra.mxu0 0.0
    %77 = vmatprep.subr.mxu0 0.0
    %78 = vmatpush1.msra.mxu0 0.0
    %79 = vmatprep.subr.mxu0 0.0
    %80 = vmatpush1.msra.mxu0 0.0
    %81 = vmatprep.subr.mxu0 0.0
    %82 = vmatpush1.msra.mxu0 0.0
    %83 = vmatprep.subr.mxu0 0.0
    %84 = vmatpush1.msra.mxu0 0.0
    %85 = vmatprep.subr.mxu0 0.0
    %86 = vmatpush1.msra.mxu0 0.0
    %87 = vmatprep.subr.mxu0 0.0
    %88 = vmatpush1.msra.mxu0 0.0
    %89 = vmatprep.subr.mxu0 0.0
    %90 = vmatpush1.msra.mxu0 0.0
    %91 = vmatprep.subr.mxu0 0.0
    %92 = vmatpush1.msra.mxu0 0.0
    %93 = vmatprep.subr.mxu0 0.0
    %94 = vmatpush1.msra.mxu0 0.0
    %95 = vmatprep.subr.mxu0 0.0
    %96 = vmatpush1.msra.mxu0 0.0
    %97 = vmatprep.subr.mxu0 0.0
    %98 = vmatpush1.msra.mxu0 0.0
    %99 = vmatprep.subr.mxu0 0.0
    %100 = vmatpush1.msra.mxu0 0.0
    %101 = vmatprep.subr.mxu0 0.0
    %102 = vmatpush1.msra.mxu0 0.0
    %103 = vmatprep.mubr.f32.mxu0 0.0
    %104 = vmatmul.mubr.f32.gmra.mrb[0].mxu0 %v37
    %v105 = vpop.f32.mrb[0].mxu0
    %v106 = vadd.f32 0.0, %v105
    %v107 = vpop.f32.mrb[0].mxu0
    %108 = vdwg.mxu0
    %v111 = vunpack.c.l.s4 1966171168
    %v112 = vunpack.c.0.s8 %v111
    %v113 = vlaneseq
    %v114 = vshrl.u32 %v113, 7
    %v115 = vsub.s32 %v112, %v114
    %v116 = vrot.slane %v106, %v115
    %v117 = vcombine.high %v116, %v116
    %v119 = vunpack.c.l.s4 1966171168
    %v120 = vunpack.c.0.s8 %v119
    %v121 = vlaneseq
    %v122 = vshrl.u32 %v121, 7
    %v123 = vsub.s32 %v120, %v122
    %v124 = vrot.slane %v116, %v123
    %v126 = vunpack.c.l.s4 1966171168
    %v127 = vunpack.c.0.s8 %v126
    %v128 = vlaneseq
    %v129 = vshrl.u32 %v128, 7
    %v130 = vsub.s32 %v127, %v129
    %v131 = vrot.slane %v117, %v130
    %v132 = vld [vmem:[%s1] sm:$0xff]
    %v133 = vld [vmem:[%s1 + $0x8] sm:$0xff]
    %v134 = vld [vmem:[%s1 + $0x10] sm:$0xff]
    %v135 = vld [vmem:[%s1 + $0x18] sm:$0xff]
    %v136 = vlaneseq
    %v137 = vshrl.u32 %v136, 7
    %v138 = vsub.s32 0, %v137
    %v139 = vrot.slane %v124, %v138
    %v140 = vlaneseq
    %v141 = vshrl.u32 %v140, 7
    %v142 = vsub.s32 0, %v141
    %v143 = vrot.slane %v131, %v142
    %v146 = vadd.f32 %v139, %v132
    %v147 = vadd.f32 %v139, %v133
    %v148 = vadd.f32 %v139, %v134
    %v149 = vadd.f32 %v139, %v135
    %v150 = vadd.f32 %v143, %v132
    %v151 = vadd.f32 %v143, %v133
    %v152 = vadd.f32 %v143, %v134
    %v153 = vadd.f32 %v143, %v135
    %154 = vadd.xlane.f32.xlu0 %v146
    %v155 = vpop.xlane.xlu0 %154
    %156 = vadd.xlane.f32.xlu0 %v147
    %v157 = vpop.xlane.xlu0 %156
    %158 = vadd.xlane.f32.xlu0 %v148
    %v159 = vpop.xlane.xlu0 %158
    %160 = vadd.xlane.f32.xlu0 %v149
    %v161 = vpop.xlane.xlu0 %160
    %162 = vadd.xlane.f32.xlu0 %v150
    %v163 = vpop.xlane.xlu0 %162
    %164 = vadd.xlane.f32.xlu0 %v151
    %v165 = vpop.xlane.xlu0 %164
    %166 = vadd.xlane.f32.xlu0 %v152
    %v167 = vpop.xlane.xlu0 %166
    %168 = vadd.xlane.f32.xlu0 %v153
    %v169 = vpop.xlane.xlu0 %168
    %v170 = vrcp.pop 128.0
    %v171 = vmul.f32 %v155, %v170
    %v172 = vmul.f32 %v157, %v170
    %v173 = vmul.f32 %v159, %v170
    %v174 = vmul.f32 %v161, %v170
    %v175 = vmul.f32 %v163, %v170
    %v176 = vmul.f32 %v165, %v170
    %v177 = vmul.f32 %v167, %v170
    %v178 = vmul.f32 %v169, %v170
    %v179 = vmul.f32 %v146, %v146
    %v180 = vmul.f32 %v147, %v147
    %v181 = vmul.f32 %v148, %v148
    %v182 = vmul.f32 %v149, %v149
    %v183 = vmul.f32 %v150, %v150
    %v184 = vmul.f32 %v151, %v151
    %v185 = vmul.f32 %v152, %v152
    %v186 = vmul.f32 %v153, %v153
    %187 = vadd.xlane.f32.xlu0 %v179
    %v188 = vpop.xlane.xlu0 %187
    %189 = vadd.xlane.f32.xlu0 %v180
    %v190 = vpop.xlane.xlu0 %189
    %191 = vadd.xlane.f32.xlu0 %v181
    %v192 = vpop.xlane.xlu0 %191
    %193 = vadd.xlane.f32.xlu0 %v182
    %v194 = vpop.xlane.xlu0 %193
    %195 = vadd.xlane.f32.xlu0 %v183
    %v196 = vpop.xlane.xlu0 %195
    %197 = vadd.xlane.f32.xlu0 %v184
    %v198 = vpop.xlane.xlu0 %197
    %199 = vadd.xlane.f32.xlu0 %v185
    %v200 = vpop.xlane.xlu0 %199
    %201 = vadd.xlane.f32.xlu0 %v186
    %v202 = vpop.xlane.xlu0 %201
    %v203 = vmul.f32 %v188, %v170
    %v204 = vmul.f32 %v190, %v170
    %v205 = vmul.f32 %v192, %v170
    %v206 = vmul.f32 %v194, %v170
    %v207 = vmul.f32 %v196, %v170
    %v208 = vmul.f32 %v198, %v170
    %v209 = vmul.f32 %v200, %v170
    %v210 = vmul.f32 %v202, %v170
    %v211 = vmul.f32 %v171, %v171
    %v212 = vmul.f32 %v172, %v172
    %v213 = vmul.f32 %v173, %v173
    %v214 = vmul.f32 %v174, %v174
    %v215 = vmul.f32 %v175, %v175
    %v216 = vmul.f32 %v176, %v176
    %v217 = vmul.f32 %v177, %v177
    %v218 = vmul.f32 %v178, %v178
    %v219 = vsub.f32 %v203, %v211
    %v220 = vsub.f32 %v204, %v212
    %v221 = vsub.f32 %v205, %v213
    %v222 = vsub.f32 %v206, %v214
    %v223 = vsub.f32 %v207, %v215
    %v224 = vsub.f32 %v208, %v216
    %v225 = vsub.f32 %v209, %v217
    %v226 = vsub.f32 %v210, %v218
    %v227 = vsub.f32 %v146, %v171
    %v228 = vsub.f32 %v147, %v172
    %v229 = vsub.f32 %v148, %v173
    %v230 = vsub.f32 %v149, %v174
    %v231 = vsub.f32 %v150, %v175
    %v232 = vsub.f32 %v151, %v176
    %v233 = vsub.f32 %v152, %v177
    %v234 = vsub.f32 %v153, %v178
    %v235 = vadd.f32 %v219, 1e-05
    %v236 = vadd.f32 %v220, 1e-05
    %v237 = vadd.f32 %v221, 1e-05
    %v238 = vadd.f32 %v222, 1e-05
    %v239 = vadd.f32 %v223, 1e-05
    %v240 = vadd.f32 %v224, 1e-05
    %v241 = vadd.f32 %v225, 1e-05
    %v242 = vadd.f32 %v226, 1e-05
    %v243 = vrsqrt.pop %v235
    %v244 = vrsqrt.pop %v236
    %v245 = vrsqrt.pop %v237
    %v246 = vrsqrt.pop %v238
    %v247 = vrsqrt.pop %v239
    %v248 = vrsqrt.pop %v240
    %v249 = vrsqrt.pop %v241
    %v250 = vrsqrt.pop %v242
    %v251 = vmul.f32 %v227, %v243
    %v252 = vmul.f32 %v228, %v244
    %v253 = vmul.f32 %v229, %v245
    %v254 = vmul.f32 %v230, %v246
    %v255 = vmul.f32 %v231, %v247
    %v256 = vmul.f32 %v232, %v248
    %v257 = vmul.f32 %v233, %v249
    %v258 = vmul.f32 %v234, %v250
    %v259 = vlaneseq
    %v260 = vshrl.u32 %v259, 7
    %v261 = vsub.s32 0, %v260
    %v262 = vrot.slane %v24, %v261
    %v263 = vmul.f32 %v251, %v262
    %v264 = vmul.f32 %v252, %v262
    %v265 = vmul.f32 %v253, %v262
    %v266 = vmul.f32 %v254, %v262
    %v267 = vmul.f32 %v255, %v262
    %v268 = vmul.f32 %v256, %v262
    %v269 = vmul.f32 %v257, %v262
    %v270 = vmul.f32 %v258, %v262
    %v271 = vlaneseq
    %v272 = vshrl.u32 %v271, 7
    %v273 = vsub.s32 1, %v272
    %v274 = vrot.slane %v24, %v273
    %v275 = vadd.f32 %v263, %v274
    %v276 = vadd.f32 %v264, %v274
    %v277 = vadd.f32 %v265, %v274
    %v278 = vadd.f32 %v266, %v274
    %v279 = vadd.f32 %v267, %v274
    %v280 = vadd.f32 %v268, %v274
    %v281 = vadd.f32 %v269, %v274
    %v282 = vadd.f32 %v270, %v274
    %v283 = vmul.f32 %v275, 0.5
    %v284 = vmul.f32 %v276, 0.5
    %v285 = vmul.f32 %v277, 0.5
    %v286 = vmul.f32 %v278, 0.5
    %v287 = vmul.f32 %v279, 0.5
    %v288 = vmul.f32 %v280, 0.5
    %v289 = vmul.f32 %v281, 0.5
    %v290 = vmul.f32 %v282, 0.5
    %v291 = vmul.f32 %v275, 0.70710677
    %v292 = vmul.f32 %v276, 0.70710677
    %v293 = vmul.f32 %v277, 0.70710677
    %v294 = vmul.f32 %v278, 0.70710677
    %v295 = vmul.f32 %v279, 0.70710677
    %v296 = vmul.f32 %v280, 0.70710677
    %v297 = vmul.f32 %v281, 0.70710677
    %v298 = vmul.f32 %v282, 0.70710677
    %v299 = verf.f32.pop %v291
    %v300 = verf.f32.pop %v292
    %v301 = verf.f32.pop %v293
    %v302 = verf.f32.pop %v294
    %v303 = verf.f32.pop %v295
    %v304 = verf.f32.pop %v296
    %v305 = verf.f32.pop %v297
    %v306 = verf.f32.pop %v298
    %v307 = vadd.f32 %v299, 1.0
    %v308 = vadd.f32 %v300, 1.0
    %v309 = vadd.f32 %v301, 1.0
    %v310 = vadd.f32 %v302, 1.0
    %v311 = vadd.f32 %v303, 1.0
    %v312 = vadd.f32 %v304, 1.0
    %v313 = vadd.f32 %v305, 1.0
    %v314 = vadd.f32 %v306, 1.0
    %v315 = vmul.f32 %v283, %v307
    %v316 = vmul.f32 %v284, %v308
    %v317 = vmul.f32 %v285, %v309
    %v318 = vmul.f32 %v286, %v310
    %v319 = vmul.f32 %v287, %v311
    %v320 = vmul.f32 %v288, %v312
    %v321 = vmul.f32 %v289, %v313
    %v322 = vmul.f32 %v290, %v314
    %v323 = vld [vmem:[%s3] sm:$0xff]
    %v324 = vld [vmem:[%s3 + $0x28] sm:$0xff]
    %v325 = vld [vmem:[%s3 + $0x50] sm:$0xff]
    %v326 = vld [vmem:[%s3 + $0x78] sm:$0xff]
    %v327 = vld [vmem:[%s3 + $0xa0] sm:$0xff]
    %v328 = vld [vmem:[%s3 + $0xc8] sm:$0xff]
    %v329 = vld [vmem:[%s3 + $0xf0] sm:$0xff]
    %v330 = vld [vmem:[%s3 + $0x118] sm:$0xff]
    %v331 = vld [vmem:[%s3 + $0x140] sm:$0xff]
    %v332 = vld [vmem:[%s3 + $0x168] sm:$0xff]
    %v333 = vld [vmem:[%s3 + $0x190] sm:$0xff]
    %v334 = vld [vmem:[%s3 + $0x1b8] sm:$0xff]
    %v335 = vld [vmem:[%s3 + $0x1e0] sm:$0xff]
    %v336 = vld [vmem:[%s3 + $0x208] sm:$0xff]
    %v337 = vld [vmem:[%s3 + $0x230] sm:$0xff]
    %v338 = vld [vmem:[%s3 + $0x258] sm:$0xff]
    %v339 = vlaneseq
    %v340 = vshrl.u32 %v339, 7
    %v341 = vsub.s32 2, %v340
    %v342 = vrot.slane %v24, %v341
    %343 = vmatprep.subr.mxu0 0.0
    %344 = vmatpush1.msra.mxu0 %v323
    %345 = vmatprep.subr.mxu0 0.0
    %346 = vmatpush1.msra.mxu0 %v324
    %347 = vmatprep.subr.mxu0 0.0
    %348 = vmatpush1.msra.mxu0 %v325
    %349 = vmatprep.subr.mxu0 0.0
    %350 = vmatpush1.msra.mxu0 %v326
    %351 = vmatprep.subr.mxu0 0.0
    %352 = vmatpush1.msra.mxu0 %v327
    %353 = vmatprep.subr.mxu0 0.0
    %354 = vmatpush1.msra.mxu0 %v328
    %355 = vmatprep.subr.mxu0 0.0
    %356 = vmatpush1.msra.mxu0 %v329
    %357 = vmatprep.subr.mxu0 0.0
    %358 = vmatpush1.msra.mxu0 %v330
    %359 = vmatprep.subr.mxu0 0.0
    %360 = vmatpush1.msra.mxu0 %v331
    %361 = vmatprep.subr.mxu0 0.0
    %362 = vmatpush1.msra.mxu0 %v332
    %363 = vmatprep.subr.mxu0 0.0
    %364 = vmatpush1.msra.mxu0 %v333
    %365 = vmatprep.subr.mxu0 0.0
    %366 = vmatpush1.msra.mxu0 %v334
    %367 = vmatprep.subr.mxu0 0.0
    %368 = vmatpush1.msra.mxu0 %v335
    %369 = vmatprep.subr.mxu0 0.0
    %370 = vmatpush1.msra.mxu0 %v336
    %371 = vmatprep.subr.mxu0 0.0
    %372 = vmatpush1.msra.mxu0 %v337
    %373 = vmatprep.subr.mxu0 0.0
    %374 = vmatpush1.msra.mxu0 %v338
    %375 = vmatprep.subr.mxu0 0.0
    %376 = vmatpush1.msra.mxu0 0.0
    %377 = vmatprep.subr.mxu0 0.0
    %378 = vmatpush1.msra.mxu0 0.0
    %379 = vmatprep.subr.mxu0 0.0
    %380 = vmatpush1.msra.mxu0 0.0
    %381 = vmatprep.subr.mxu0 0.0
    %382 = vmatpush1.msra.mxu0 0.0
    %383 = vmatprep.subr.mxu0 0.0
    %384 = vmatpush1.msra.mxu0 0.0
    %385 = vmatprep.subr.mxu0 0.0
    %386 = vmatpush1.msra.mxu0 0.0
    %387 = vmatprep.subr.mxu0 0.0
    %388 = vmatpush1.msra.mxu0 0.0
    %389 = vmatprep.subr.mxu0 0.0
    %390 = vmatpush1.msra.mxu0 0.0
    %391 = vmatprep.subr.mxu0 0.0
    %392 = vmatpush1.msra.mxu0 0.0
    %393 = vmatprep.subr.mxu0 0.0
    %394 = vmatpush1.msra.mxu0 0.0
    %395 = vmatprep.subr.mxu0 0.0
    %396 = vmatpush1.msra.mxu0 0.0
    %397 = vmatprep.subr.mxu0 0.0
    %398 = vmatpush1.msra.mxu0 0.0
    %399 = vmatprep.subr.mxu0 0.0
    %400 = vmatpush1.msra.mxu0 0.0
    %401 = vmatprep.subr.mxu0 0.0
    %402 = vmatpush1.msra.mxu0 0.0
    %403 = vmatprep.subr.mxu0 0.0
    %404 = vmatpush1.msra.mxu0 0.0
    %405 = vmatprep.subr.mxu0 0.0
    %406 = vmatpush1.msra.mxu0 0.0
    %407 = vmatprep.mubr.f32.mxu0 0.0
    %408 = vmatmul.mubr.f32.gmra.mrb[0].mxu0 %v315
    %v409 = vpop.f32.mrb[0].mxu0
    %v410 = vadd.f32 %v342, %v409
    %v411 = vpop.f32.mrb[0].mxu0
    %412 = vmatprep.mubr.f32.mxu0 0.0
    %413 = vmatmul.mubr.f32.gmra.mrb[0].mxu0 %v316
    %v414 = vpop.f32.mrb[0].mxu0
    %v415 = vadd.f32 %v342, %v414
    %v416 = vpop.f32.mrb[0].mxu0
    %417 = vmatprep.mubr.f32.mxu0 0.0
    %418 = vmatmul.mubr.f32.gmra.mrb[0].mxu0 %v317
    %v419 = vpop.f32.mrb[0].mxu0
    %v420 = vadd.f32 %v342, %v419
    %v421 = vpop.f32.mrb[0].mxu0
    %422 = vmatprep.mubr.f32.mxu0 0.0
    %423 = vmatmul.mubr.f32.gmra.mrb[0].mxu0 %v318
    %v424 = vpop.f32.mrb[0].mxu0
    %v425 = vadd.f32 %v342, %v424
    %v426 = vpop.f32.mrb[0].mxu0
    %427 = vmatprep.mubr.f32.mxu0 0.0
    %428 = vmatmul.mubr.f32.gmra.mrb[0].mxu0 %v319
    %v429 = vpop.f32.mrb[0].mxu0
    %v430 = vadd.f32 %v342, %v429
    %v431 = vpop.f32.mrb[0].mxu0
    %432 = vmatprep.mubr.f32.mxu0 0.0
    %433 = vmatmul.mubr.f32.gmra.mrb[0].mxu0 %v320
    %v434 = vpop.f32.mrb[0].mxu0
    %v435 = vadd.f32 %v342, %v434
    %v436 = vpop.f32.mrb[0].mxu0
    %437 = vmatprep.mubr.f32.mxu0 0.0
    %438 = vmatmul.mubr.f32.gmra.mrb[0].mxu0 %v321
    %v439 = vpop.f32.mrb[0].mxu0
    %v440 = vadd.f32 %v342, %v439
    %v441 = vpop.f32.mrb[0].mxu0
    %442 = vmatprep.mubr.f32.mxu0 0.0
    %443 = vmatmul.mubr.f32.gmra.mrb[0].mxu0 %v322
    %v444 = vpop.f32.mrb[0].mxu0
    %v445 = vadd.f32 %v342, %v444
    %v446 = vpop.f32.mrb[0].mxu0
    %447 = vdwg.mxu0
    %448 = vadd.xlane.f32.xlu0 %v410
    %v449 = vpop.xlane.xlu0 %448
    %450 = vadd.xlane.f32.xlu0 %v415
    %v451 = vpop.xlane.xlu0 %450
    %452 = vadd.xlane.f32.xlu0 %v420
    %v453 = vpop.xlane.xlu0 %452
    %454 = vadd.xlane.f32.xlu0 %v425
    %v455 = vpop.xlane.xlu0 %454
    %456 = vadd.xlane.f32.xlu0 %v430
    %v457 = vpop.xlane.xlu0 %456
    %458 = vadd.xlane.f32.xlu0 %v435
    %v459 = vpop.xlane.xlu0 %458
    %460 = vadd.xlane.f32.xlu0 %v440
    %v461 = vpop.xlane.xlu0 %460
    %462 = vadd.xlane.f32.xlu0 %v445
    %v463 = vpop.xlane.xlu0 %462
    %v464 = vmul.f32 %v449, %v170
    %v465 = vmul.f32 %v451, %v170
    %v466 = vmul.f32 %v453, %v170
    %v467 = vmul.f32 %v455, %v170
    %v468 = vmul.f32 %v457, %v170
    %v469 = vmul.f32 %v459, %v170
    %v470 = vmul.f32 %v461, %v170
    %v471 = vmul.f32 %v463, %v170
    %v472 = vmul.f32 %v410, %v410
    %v473 = vmul.f32 %v415, %v415
    %v474 = vmul.f32 %v420, %v420
    %v475 = vmul.f32 %v425, %v425
    %v476 = vmul.f32 %v430, %v430
    %v477 = vmul.f32 %v435, %v435
    %v478 = vmul.f32 %v440, %v440
    %v479 = vmul.f32 %v445, %v445
    %480 = vadd.xlane.f32.xlu0 %v472
    %v481 = vpop.xlane.xlu0 %480
    %482 = vadd.xlane.f32.xlu0 %v473
    %v483 = vpop.xlane.xlu0 %482
    %484 = vadd.xlane.f32.xlu0 %v474
    %v485 = vpop.xlane.xlu0 %484
    %486 = vadd.xlane.f32.xlu0 %v475
    %v487 = vpop.xlane.xlu0 %486
    %488 = vadd.xlane.f32.xlu0 %v476
    %v489 = vpop.xlane.xlu0 %488
    %490 = vadd.xlane.f32.xlu0 %v477
    %v491 = vpop.xlane.xlu0 %490
    %492 = vadd.xlane.f32.xlu0 %v478
    %v493 = vpop.xlane.xlu0 %492
    %494 = vadd.xlane.f32.xlu0 %v479
    %v495 = vpop.xlane.xlu0 %494
    %v496 = vmul.f32 %v481, %v170
    %v497 = vmul.f32 %v483, %v170
    %v498 = vmul.f32 %v485, %v170
    %v499 = vmul.f32 %v487, %v170
    %v500 = vmul.f32 %v489, %v170
    %v501 = vmul.f32 %v491, %v170
    %v502 = vmul.f32 %v493, %v170
    %v503 = vmul.f32 %v495, %v170
    %v504 = vmul.f32 %v464, %v464
    %v505 = vmul.f32 %v465, %v465
    %v506 = vmul.f32 %v466, %v466
    %v507 = vmul.f32 %v467, %v467
    %v508 = vmul.f32 %v468, %v468
    %v509 = vmul.f32 %v469, %v469
    %v510 = vmul.f32 %v470, %v470
    %v511 = vmul.f32 %v471, %v471
    %v512 = vsub.f32 %v496, %v504
    %v513 = vsub.f32 %v497, %v505
    %v514 = vsub.f32 %v498, %v506
    %v515 = vsub.f32 %v499, %v507
    %v516 = vsub.f32 %v500, %v508
    %v517 = vsub.f32 %v501, %v509
    %v518 = vsub.f32 %v502, %v510
    %v519 = vsub.f32 %v503, %v511
    %v520 = vsub.f32 %v410, %v464
    %v521 = vsub.f32 %v415, %v465
    %v522 = vsub.f32 %v420, %v466
    %v523 = vsub.f32 %v425, %v467
    %v524 = vsub.f32 %v430, %v468
    %v525 = vsub.f32 %v435, %v469
    %v526 = vsub.f32 %v440, %v470
    %v527 = vsub.f32 %v445, %v471
    %v528 = vadd.f32 %v512, 1e-05
    %v529 = vadd.f32 %v513, 1e-05
    %v530 = vadd.f32 %v514, 1e-05
    %v531 = vadd.f32 %v515, 1e-05
    %v532 = vadd.f32 %v516, 1e-05
    %v533 = vadd.f32 %v517, 1e-05
    %v534 = vadd.f32 %v518, 1e-05
    %v535 = vadd.f32 %v519, 1e-05
    %v536 = vrsqrt.pop %v528
    %v537 = vrsqrt.pop %v529
    %v538 = vrsqrt.pop %v530
    %v539 = vrsqrt.pop %v531
    %v540 = vrsqrt.pop %v532
    %v541 = vrsqrt.pop %v533
    %v542 = vrsqrt.pop %v534
    %v543 = vrsqrt.pop %v535
    %v544 = vmul.f32 %v520, %v536
    %v545 = vmul.f32 %v521, %v537
    %v546 = vmul.f32 %v522, %v538
    %v547 = vmul.f32 %v523, %v539
    %v548 = vmul.f32 %v524, %v540
    %v549 = vmul.f32 %v525, %v541
    %v550 = vmul.f32 %v526, %v542
    %v551 = vmul.f32 %v527, %v543
    %v552 = vlaneseq
    %v553 = vshrl.u32 %v552, 7
    %v554 = vsub.s32 3, %v553
    %v555 = vrot.slane %v24, %v554
    %v556 = vmul.f32 %v544, %v555
    %v557 = vmul.f32 %v545, %v555
    %v558 = vmul.f32 %v546, %v555
    %v559 = vmul.f32 %v547, %v555
    %v560 = vmul.f32 %v548, %v555
    %v561 = vmul.f32 %v549, %v555
    %v562 = vmul.f32 %v550, %v555
    %v563 = vmul.f32 %v551, %v555
    %v564 = vlaneseq
    %v565 = vshrl.u32 %v564, 7
    %v566 = vsub.s32 4, %v565
    %v567 = vrot.slane %v24, %v566
    %v568 = vadd.f32 %v556, %v567
    %v569 = vadd.f32 %v557, %v567
    %v570 = vadd.f32 %v558, %v567
    %v571 = vadd.f32 %v559, %v567
    %v572 = vadd.f32 %v560, %v567
    %v573 = vadd.f32 %v561, %v567
    %v574 = vadd.f32 %v562, %v567
    %v575 = vadd.f32 %v563, %v567
    %v576 = vmul.f32 %v568, 0.5
    %v577 = vmul.f32 %v569, 0.5
    %v578 = vmul.f32 %v570, 0.5
    %v579 = vmul.f32 %v571, 0.5
    %v580 = vmul.f32 %v572, 0.5
    %v581 = vmul.f32 %v573, 0.5
    %v582 = vmul.f32 %v574, 0.5
    %v583 = vmul.f32 %v575, 0.5
    %v584 = vmul.f32 %v568, 0.70710677
    %v585 = vmul.f32 %v569, 0.70710677
    %v586 = vmul.f32 %v570, 0.70710677
    %v587 = vmul.f32 %v571, 0.70710677
    %v588 = vmul.f32 %v572, 0.70710677
    %v589 = vmul.f32 %v573, 0.70710677
    %v590 = vmul.f32 %v574, 0.70710677
    %v591 = vmul.f32 %v575, 0.70710677
    %v592 = verf.f32.pop %v584
    %v593 = verf.f32.pop %v585
    %v594 = verf.f32.pop %v586
    %v595 = verf.f32.pop %v587
    %v596 = verf.f32.pop %v588
    %v597 = verf.f32.pop %v589
    %v598 = verf.f32.pop %v590
    %v599 = verf.f32.pop %v591
    %v600 = vadd.f32 %v592, 1.0
    %v601 = vadd.f32 %v593, 1.0
    %v602 = vadd.f32 %v594, 1.0
    %v603 = vadd.f32 %v595, 1.0
    %v604 = vadd.f32 %v596, 1.0
    %v605 = vadd.f32 %v597, 1.0
    %v606 = vadd.f32 %v598, 1.0
    %v607 = vadd.f32 %v599, 1.0
    %v608 = vmul.f32 %v576, %v600
    %v609 = vmul.f32 %v577, %v601
    %v610 = vmul.f32 %v578, %v602
    %v611 = vmul.f32 %v579, %v603
    %v612 = vmul.f32 %v580, %v604
    %v613 = vmul.f32 %v581, %v605
    %v614 = vmul.f32 %v582, %v606
    %v615 = vmul.f32 %v583, %v607
    %v616 = vld [vmem:[%s3 + $0x8] sm:$0xff]
    %v617 = vld [vmem:[%s3 + $0x10] sm:$0xff]
    %v618 = vld [vmem:[%s3 + $0x30] sm:$0xff]
    %v619 = vld [vmem:[%s3 + $0x38] sm:$0xff]
    %v620 = vld [vmem:[%s3 + $0x58] sm:$0xff]
    %v621 = vld [vmem:[%s3 + $0x60] sm:$0xff]
    %v622 = vld [vmem:[%s3 + $0x80] sm:$0xff]
    %v623 = vld [vmem:[%s3 + $0x88] sm:$0xff]
    %v624 = vld [vmem:[%s3 + $0xa8] sm:$0xff]
    %v625 = vld [vmem:[%s3 + $0xb0] sm:$0xff]
    %v626 = vld [vmem:[%s3 + $0xd0] sm:$0xff]
    %v627 = vld [vmem:[%s3 + $0xd8] sm:$0xff]
    %v628 = vld [vmem:[%s3 + $0xf8] sm:$0xff]
    %v629 = vld [vmem:[%s3 + $0x100] sm:$0xff]
    %v630 = vld [vmem:[%s3 + $0x120] sm:$0xff]
    %v631 = vld [vmem:[%s3 + $0x128] sm:$0xff]
    %v632 = vld [vmem:[%s3 + $0x148] sm:$0xff]
    %v633 = vld [vmem:[%s3 + $0x150] sm:$0xff]
    %v634 = vld [vmem:[%s3 + $0x170] sm:$0xff]
    %v635 = vld [vmem:[%s3 + $0x178] sm:$0xff]
    %v636 = vld [vmem:[%s3 + $0x198] sm:$0xff]
    %v637 = vld [vmem:[%s3 + $0x1a0] sm:$0xff]
    %v638 = vld [vmem:[%s3 + $0x1c0] sm:$0xff]
    %v639 = vld [vmem:[%s3 + $0x1c8] sm:$0xff]
    %v640 = vld [vmem:[%s3 + $0x1e8] sm:$0xff]
    %v641 = vld [vmem:[%s3 + $0x1f0] sm:$0xff]
    %v642 = vld [vmem:[%s3 + $0x210] sm:$0xff]
    %v643 = vld [vmem:[%s3 + $0x218] sm:$0xff]
    %v644 = vld [vmem:[%s3 + $0x238] sm:$0xff]
    %v645 = vld [vmem:[%s3 + $0x240] sm:$0xff]
    %v646 = vld [vmem:[%s3 + $0x260] sm:$0xff]
    %v647 = vld [vmem:[%s3 + $0x268] sm:$0xff]
    %648 = vmatprep.subr.mxu0 %v617
    %649 = vmatpush1.msra.mxu0 %v616
    %650 = vmatprep.subr.mxu0 %v619
    %651 = vmatpush1.msra.mxu0 %v618
    %652 = vmatprep.subr.mxu0 %v621
    %653 = vmatpush1.msra.mxu0 %v620
    %654 = vmatprep.subr.mxu0 %v623
    %655 = vmatpush1.msra.mxu0 %v622
    %656 = vmatprep.subr.mxu0 %v625
    %657 = vmatpush1.msra.mxu0 %v624
    %658 = vmatprep.subr.mxu0 %v627
    %659 = vmatpush1.msra.mxu0 %v626
    %660 = vmatprep.subr.mxu0 %v629
    %661 = vmatpush1.msra.mxu0 %v628
    %662 = vmatprep.subr.mxu0 %v631
    %663 = vmatpush1.msra.mxu0 %v630
    %664 = vmatprep.subr.mxu0 %v633
    %665 = vmatpush1.msra.mxu0 %v632
    %666 = vmatprep.subr.mxu0 %v635
    %667 = vmatpush1.msra.mxu0 %v634
    %668 = vmatprep.subr.mxu0 %v637
    %669 = vmatpush1.msra.mxu0 %v636
    %670 = vmatprep.subr.mxu0 %v639
    %671 = vmatpush1.msra.mxu0 %v638
    %672 = vmatprep.subr.mxu0 %v641
    %673 = vmatpush1.msra.mxu0 %v640
    %674 = vmatprep.subr.mxu0 %v643
    %675 = vmatpush1.msra.mxu0 %v642
    %676 = vmatprep.subr.mxu0 %v645
    %677 = vmatpush1.msra.mxu0 %v644
    %678 = vmatprep.subr.mxu0 %v647
    %679 = vmatpush1.msra.mxu0 %v646
    %680 = vmatprep.subr.mxu0 0.0
    %681 = vmatpush1.msra.mxu0 0.0
    %682 = vmatprep.subr.mxu0 0.0
    %683 = vmatpush1.msra.mxu0 0.0
    %684 = vmatprep.subr.mxu0 0.0
    %685 = vmatpush1.msra.mxu0 0.0
    %686 = vmatprep.subr.mxu0 0.0
    %687 = vmatpush1.msra.mxu0 0.0
    %688 = vmatprep.subr.mxu0 0.0
    %689 = vmatpush1.msra.mxu0 0.0
    %690 = vmatprep.subr.mxu0 0.0
    %691 = vmatpush1.msra.mxu0 0.0
    %692 = vmatprep.subr.mxu0 0.0
    %693 = vmatpush1.msra.mxu0 0.0
    %694 = vmatprep.subr.mxu0 0.0
    %695 = vmatpush1.msra.mxu0 0.0
    %696 = vmatprep.subr.mxu0 0.0
    %697 = vmatpush1.msra.mxu0 0.0
    %698 = vmatprep.subr.mxu0 0.0
    %699 = vmatpush1.msra.mxu0 0.0
    %700 = vmatprep.subr.mxu0 0.0
    %701 = vmatpush1.msra.mxu0 0.0
    %702 = vmatprep.subr.mxu0 0.0
    %703 = vmatpush1.msra.mxu0 0.0
    %704 = vmatprep.subr.mxu0 0.0
    %705 = vmatpush1.msra.mxu0 0.0
    %706 = vmatprep.subr.mxu0 0.0
    %707 = vmatpush1.msra.mxu0 0.0
    %708 = vmatprep.subr.mxu0 0.0
    %709 = vmatpush1.msra.mxu0 0.0
    %710 = vmatprep.subr.mxu0 0.0
    %711 = vmatpush1.msra.mxu0 0.0
    %712 = vmatprep.mubr.f32.mxu0 0.0
    %713 = vmatmul.mubr.f32.gmra.mrb[0].mxu0 %v608
    %v714 = vpop.f32.mrb[0].mxu0
    %v715 = vadd.f32 0.0, %v714
    %v716 = vpop.f32.mrb[0].mxu0
    %v717 = vadd.f32 0.0, %v716
    %718 = vmatprep.mubr.f32.mxu0 0.0
    %719 = vmatmul.mubr.f32.gmra.mrb[0].mxu0 %v609
    %v720 = vpop.f32.mrb[0].mxu0
    %v721 = vadd.f32 0.0, %v720
    %v722 = vpop.f32.mrb[0].mxu0
    %v723 = vadd.f32 0.0, %v722
    %724 = vmatprep.mubr.f32.mxu0 0.0
    %725 = vmatmul.mubr.f32.gmra.mrb[0].mxu0 %v610
    %v726 = vpop.f32.mrb[0].mxu0
    %v727 = vadd.f32 0.0, %v726
    %v728 = vpop.f32.mrb[0].mxu0
    %v729 = vadd.f32 0.0, %v728
    %730 = vmatprep.mubr.f32.mxu0 0.0
    %731 = vmatmul.mubr.f32.gmra.mrb[0].mxu0 %v611
    %v732 = vpop.f32.mrb[0].mxu0
    %v733 = vadd.f32 0.0, %v732
    %v734 = vpop.f32.mrb[0].mxu0
    %v735 = vadd.f32 0.0, %v734
    %736 = vmatprep.mubr.f32.mxu0 0.0
    %737 = vmatmul.mubr.f32.gmra.mrb[0].mxu0 %v612
    %v738 = vpop.f32.mrb[0].mxu0
    %v739 = vadd.f32 0.0, %v738
    %v740 = vpop.f32.mrb[0].mxu0
    %v741 = vadd.f32 0.0, %v740
    %742 = vmatprep.mubr.f32.mxu0 0.0
    %743 = vmatmul.mubr.f32.gmra.mrb[0].mxu0 %v613
    %v744 = vpop.f32.mrb[0].mxu0
    %v745 = vadd.f32 0.0, %v744
    %v746 = vpop.f32.mrb[0].mxu0
    %v747 = vadd.f32 0.0, %v746
    %748 = vmatprep.mubr.f32.mxu0 0.0
    %749 = vmatmul.mubr.f32.gmra.mrb[0].mxu0 %v614
    %v750 = vpop.f32.mrb[0].mxu0
    %v751 = vadd.f32 0.0, %v750
    %v752 = vpop.f32.mrb[0].mxu0
    %v753 = vadd.f32 0.0, %v752
    %754 = vmatprep.mubr.f32.mxu0 0.0
    %755 = vmatmul.mubr.f32.gmra.mrb[0].mxu0 %v615
    %v756 = vpop.f32.mrb[0].mxu0
    %v757 = vadd.f32 0.0, %v756
    %v758 = vpop.f32.mrb[0].mxu0
    %v759 = vadd.f32 0.0, %v758
    %760 = vdwg.mxu0
    %v761 = vlaneseq
    %v762 = vshrl.u32 %v761, 7
    %v763 = vsub.s32 5, %v762
    %v764 = vrot.slane %v24, %v763
    %v765 = vadd.f32 %v715, %v764
    %v766 = vadd.f32 %v721, %v764
    %v767 = vadd.f32 %v727, %v764
    %v768 = vadd.f32 %v733, %v764
    %v769 = vadd.f32 %v739, %v764
    %v770 = vadd.f32 %v745, %v764
    %v771 = vadd.f32 %v751, %v764
    %v772 = vadd.f32 %v757, %v764
    %773 = vadd.xlane.f32.xlu0 %v765
    %v774 = vpop.xlane.xlu0 %773
    %775 = vadd.xlane.f32.xlu0 %v766
    %v776 = vpop.xlane.xlu0 %775
    %777 = vadd.xlane.f32.xlu0 %v767
    %v778 = vpop.xlane.xlu0 %777
    %779 = vadd.xlane.f32.xlu0 %v768
    %v780 = vpop.xlane.xlu0 %779
    %781 = vadd.xlane.f32.xlu0 %v769
    %v782 = vpop.xlane.xlu0 %781
    %783 = vadd.xlane.f32.xlu0 %v770
    %v784 = vpop.xlane.xlu0 %783
    %785 = vadd.xlane.f32.xlu0 %v771
    %v786 = vpop.xlane.xlu0 %785
    %787 = vadd.xlane.f32.xlu0 %v772
    %v788 = vpop.xlane.xlu0 %787
    %v789 = vmul.f32 %v774, %v170
    %v790 = vmul.f32 %v776, %v170
    %v791 = vmul.f32 %v778, %v170
    %v792 = vmul.f32 %v780, %v170
    %v793 = vmul.f32 %v782, %v170
    %v794 = vmul.f32 %v784, %v170
    %v795 = vmul.f32 %v786, %v170
    %v796 = vmul.f32 %v788, %v170
    %v797 = vmul.f32 %v765, %v765
    %v798 = vmul.f32 %v766, %v766
    %v799 = vmul.f32 %v767, %v767
    %v800 = vmul.f32 %v768, %v768
    %v801 = vmul.f32 %v769, %v769
    %v802 = vmul.f32 %v770, %v770
    %v803 = vmul.f32 %v771, %v771
    %v804 = vmul.f32 %v772, %v772
    %805 = vadd.xlane.f32.xlu0 %v797
    %v806 = vpop.xlane.xlu0 %805
    %807 = vadd.xlane.f32.xlu0 %v798
    %v808 = vpop.xlane.xlu0 %807
    %809 = vadd.xlane.f32.xlu0 %v799
    %v810 = vpop.xlane.xlu0 %809
    %811 = vadd.xlane.f32.xlu0 %v800
    %v812 = vpop.xlane.xlu0 %811
    %813 = vadd.xlane.f32.xlu0 %v801
    %v814 = vpop.xlane.xlu0 %813
    %815 = vadd.xlane.f32.xlu0 %v802
    %v816 = vpop.xlane.xlu0 %815
    %817 = vadd.xlane.f32.xlu0 %v803
    %v818 = vpop.xlane.xlu0 %817
    %819 = vadd.xlane.f32.xlu0 %v804
    %v820 = vpop.xlane.xlu0 %819
    %v821 = vmul.f32 %v806, %v170
    %v822 = vmul.f32 %v808, %v170
    %v823 = vmul.f32 %v810, %v170
    %v824 = vmul.f32 %v812, %v170
    %v825 = vmul.f32 %v814, %v170
    %v826 = vmul.f32 %v816, %v170
    %v827 = vmul.f32 %v818, %v170
    %v828 = vmul.f32 %v820, %v170
    %v829 = vmul.f32 %v789, %v789
    %v830 = vmul.f32 %v790, %v790
    %v831 = vmul.f32 %v791, %v791
    %v832 = vmul.f32 %v792, %v792
    %v833 = vmul.f32 %v793, %v793
    %v834 = vmul.f32 %v794, %v794
    %v835 = vmul.f32 %v795, %v795
    %v836 = vmul.f32 %v796, %v796
    %v837 = vsub.f32 %v821, %v829
    %v838 = vsub.f32 %v822, %v830
    %v839 = vsub.f32 %v823, %v831
    %v840 = vsub.f32 %v824, %v832
    %v841 = vsub.f32 %v825, %v833
    %v842 = vsub.f32 %v826, %v834
    %v843 = vsub.f32 %v827, %v835
    %v844 = vsub.f32 %v828, %v836
    %v845 = vsub.f32 %v765, %v789
    %v846 = vsub.f32 %v766, %v790
    %v847 = vsub.f32 %v767, %v791
    %v848 = vsub.f32 %v768, %v792
    %v849 = vsub.f32 %v769, %v793
    %v850 = vsub.f32 %v770, %v794
    %v851 = vsub.f32 %v771, %v795
    %v852 = vsub.f32 %v772, %v796
    %v853 = vadd.f32 %v837, 1e-05
    %v854 = vadd.f32 %v838, 1e-05
    %v855 = vadd.f32 %v839, 1e-05
    %v856 = vadd.f32 %v840, 1e-05
    %v857 = vadd.f32 %v841, 1e-05
    %v858 = vadd.f32 %v842, 1e-05
    %v859 = vadd.f32 %v843, 1e-05
    %v860 = vadd.f32 %v844, 1e-05
    %v861 = vrsqrt.pop %v853
    %v862 = vrsqrt.pop %v854
    %v863 = vrsqrt.pop %v855
    %v864 = vrsqrt.pop %v856
    %v865 = vrsqrt.pop %v857
    %v866 = vrsqrt.pop %v858
    %v867 = vrsqrt.pop %v859
    %v868 = vrsqrt.pop %v860
    %v869 = vmul.f32 %v845, %v861
    %v870 = vmul.f32 %v846, %v862
    %v871 = vmul.f32 %v847, %v863
    %v872 = vmul.f32 %v848, %v864
    %v873 = vmul.f32 %v849, %v865
    %v874 = vmul.f32 %v850, %v866
    %v875 = vmul.f32 %v851, %v867
    %v876 = vmul.f32 %v852, %v868
    %v877 = vlaneseq
    %v878 = vshrl.u32 %v877, 7
    %v879 = vsub.s32 6, %v878
    %v880 = vrot.slane %v24, %v879
    %v881 = vmul.f32 %v869, %v880
    %v882 = vmul.f32 %v870, %v880
    %v883 = vmul.f32 %v871, %v880
    %v884 = vmul.f32 %v872, %v880
    %v885 = vmul.f32 %v873, %v880
    %v886 = vmul.f32 %v874, %v880
    %v887 = vmul.f32 %v875, %v880
    %v888 = vmul.f32 %v876, %v880
    %v889 = vlaneseq
    %v890 = vshrl.u32 %v889, 7
    %v891 = vsub.s32 7, %v890
    %v892 = vrot.slane %v24, %v891
    %v893 = vadd.f32 %v881, %v892
    %v894 = vadd.f32 %v882, %v892
    %v895 = vadd.f32 %v883, %v892
    %v896 = vadd.f32 %v884, %v892
    %v897 = vadd.f32 %v885, %v892
    %v898 = vadd.f32 %v886, %v892
    %v899 = vadd.f32 %v887, %v892
    %v900 = vadd.f32 %v888, %v892
    %v901 = vmul.f32 %v893, 0.5
    %v902 = vmul.f32 %v894, 0.5
    %v903 = vmul.f32 %v895, 0.5
    %v904 = vmul.f32 %v896, 0.5
    %v905 = vmul.f32 %v897, 0.5
    %v906 = vmul.f32 %v898, 0.5
    %v907 = vmul.f32 %v899, 0.5
    %v908 = vmul.f32 %v900, 0.5
    %v909 = vmul.f32 %v893, 0.70710677
    %v910 = vmul.f32 %v894, 0.70710677
    %v911 = vmul.f32 %v895, 0.70710677
    %v912 = vmul.f32 %v896, 0.70710677
    %v913 = vmul.f32 %v897, 0.70710677
    %v914 = vmul.f32 %v898, 0.70710677
    %v915 = vmul.f32 %v899, 0.70710677
    %v916 = vmul.f32 %v900, 0.70710677
    %v917 = verf.f32.pop %v909
    %v918 = verf.f32.pop %v910
    %v919 = verf.f32.pop %v911
    %v920 = verf.f32.pop %v912
    %v921 = verf.f32.pop %v913
    %v922 = verf.f32.pop %v914
    %v923 = verf.f32.pop %v915
    %v924 = verf.f32.pop %v916
    %v925 = vadd.f32 %v917, 1.0
    %v926 = vadd.f32 %v918, 1.0
    %v927 = vadd.f32 %v919, 1.0
    %v928 = vadd.f32 %v920, 1.0
    %v929 = vadd.f32 %v921, 1.0
    %v930 = vadd.f32 %v922, 1.0
    %v931 = vadd.f32 %v923, 1.0
    %v932 = vadd.f32 %v924, 1.0
    %v933 = vmul.f32 %v901, %v925
    %v934 = vmul.f32 %v902, %v926
    %v935 = vmul.f32 %v903, %v927
    %v936 = vmul.f32 %v904, %v928
    %v937 = vmul.f32 %v905, %v929
    %v938 = vmul.f32 %v906, %v930
    %v939 = vmul.f32 %v907, %v931
    %v940 = vmul.f32 %v908, %v932
    %v941 = vlaneseq
    %v942 = vshrl.u32 %v941, 7
    %v943 = vsub.s32 1, %v942
    %v944 = vrot.slane %v25, %v943
    %v945 = vadd.f32 %v717, %v944
    %v946 = vadd.f32 %v723, %v944
    %v947 = vadd.f32 %v729, %v944
    %v948 = vadd.f32 %v735, %v944
    %v949 = vadd.f32 %v741, %v944
    %v950 = vadd.f32 %v747, %v944
    %v951 = vadd.f32 %v753, %v944
    %v952 = vadd.f32 %v759, %v944
    %953 = vadd.xlane.f32.xlu0 %v945
    %v954 = vpop.xlane.xlu0 %953
    %955 = vadd.xlane.f32.xlu0 %v946
    %v956 = vpop.xlane.xlu0 %955
    %957 = vadd.xlane.f32.xlu0 %v947
    %v958 = vpop.xlane.xlu0 %957
    %959 = vadd.xlane.f32.xlu0 %v948
    %v960 = vpop.xlane.xlu0 %959
    %961 = vadd.xlane.f32.xlu0 %v949
    %v962 = vpop.xlane.xlu0 %961
    %963 = vadd.xlane.f32.xlu0 %v950
    %v964 = vpop.xlane.xlu0 %963
    %965 = vadd.xlane.f32.xlu0 %v951
    %v966 = vpop.xlane.xlu0 %965
    %967 = vadd.xlane.f32.xlu0 %v952
    %v968 = vpop.xlane.xlu0 %967
    %v969 = vmul.f32 %v954, %v170
    %v970 = vmul.f32 %v956, %v170
    %v971 = vmul.f32 %v958, %v170
    %v972 = vmul.f32 %v960, %v170
    %v973 = vmul.f32 %v962, %v170
    %v974 = vmul.f32 %v964, %v170
    %v975 = vmul.f32 %v966, %v170
    %v976 = vmul.f32 %v968, %v170
    %v977 = vmul.f32 %v945, %v945
    %v978 = vmul.f32 %v946, %v946
    %v979 = vmul.f32 %v947, %v947
    %v980 = vmul.f32 %v948, %v948
    %v981 = vmul.f32 %v949, %v949
    %v982 = vmul.f32 %v950, %v950
    %v983 = vmul.f32 %v951, %v951
    %v984 = vmul.f32 %v952, %v952
    %985 = vadd.xlane.f32.xlu0 %v977
    %v986 = vpop.xlane.xlu0 %985
    %987 = vadd.xlane.f32.xlu0 %v978
    %v988 = vpop.xlane.xlu0 %987
    %989 = vadd.xlane.f32.xlu0 %v979
    %v990 = vpop.xlane.xlu0 %989
    %991 = vadd.xlane.f32.xlu0 %v980
    %v992 = vpop.xlane.xlu0 %991
    %993 = vadd.xlane.f32.xlu0 %v981
    %v994 = vpop.xlane.xlu0 %993
    %995 = vadd.xlane.f32.xlu0 %v982
    %v996 = vpop.xlane.xlu0 %995
    %997 = vadd.xlane.f32.xlu0 %v983
    %v998 = vpop.xlane.xlu0 %997
    %999 = vadd.xlane.f32.xlu0 %v984
    %v1000 = vpop.xlane.xlu0 %999
    %v1001 = vmul.f32 %v986, %v170
    %v1002 = vmul.f32 %v988, %v170
    %v1003 = vmul.f32 %v990, %v170
    %v1004 = vmul.f32 %v992, %v170
    %v1005 = vmul.f32 %v994, %v170
    %v1006 = vmul.f32 %v996, %v170
    %v1007 = vmul.f32 %v998, %v170
    %v1008 = vmul.f32 %v1000, %v170
    %v1009 = vmul.f32 %v969, %v969
    %v1010 = vmul.f32 %v970, %v970
    %v1011 = vmul.f32 %v971, %v971
    %v1012 = vmul.f32 %v972, %v972
    %v1013 = vmul.f32 %v973, %v973
    %v1014 = vmul.f32 %v974, %v974
    %v1015 = vmul.f32 %v975, %v975
    %v1016 = vmul.f32 %v976, %v976
    %v1017 = vsub.f32 %v1001, %v1009
    %v1018 = vsub.f32 %v1002, %v1010
    %v1019 = vsub.f32 %v1003, %v1011
    %v1020 = vsub.f32 %v1004, %v1012
    %v1021 = vsub.f32 %v1005, %v1013
    %v1022 = vsub.f32 %v1006, %v1014
    %v1023 = vsub.f32 %v1007, %v1015
    %v1024 = vsub.f32 %v1008, %v1016
    %v1025 = vsub.f32 %v945, %v969
    %v1026 = vsub.f32 %v946, %v970
    %v1027 = vsub.f32 %v947, %v971
    %v1028 = vsub.f32 %v948, %v972
    %v1029 = vsub.f32 %v949, %v973
    %v1030 = vsub.f32 %v950, %v974
    %v1031 = vsub.f32 %v951, %v975
    %v1032 = vsub.f32 %v952, %v976
    %v1033 = vadd.f32 %v1017, 1e-05
    %v1034 = vadd.f32 %v1018, 1e-05
    %v1035 = vadd.f32 %v1019, 1e-05
    %v1036 = vadd.f32 %v1020, 1e-05
    %v1037 = vadd.f32 %v1021, 1e-05
    %v1038 = vadd.f32 %v1022, 1e-05
    %v1039 = vadd.f32 %v1023, 1e-05
    %v1040 = vadd.f32 %v1024, 1e-05
    %v1041 = vrsqrt.pop %v1033
    %v1042 = vrsqrt.pop %v1034
    %v1043 = vrsqrt.pop %v1035
    %v1044 = vrsqrt.pop %v1036
    %v1045 = vrsqrt.pop %v1037
    %v1046 = vrsqrt.pop %v1038
    %v1047 = vrsqrt.pop %v1039
    %v1048 = vrsqrt.pop %v1040
    %v1049 = vmul.f32 %v1025, %v1041
    %v1050 = vmul.f32 %v1026, %v1042
    %v1051 = vmul.f32 %v1027, %v1043
    %v1052 = vmul.f32 %v1028, %v1044
    %v1053 = vmul.f32 %v1029, %v1045
    %v1054 = vmul.f32 %v1030, %v1046
    %v1055 = vmul.f32 %v1031, %v1047
    %v1056 = vmul.f32 %v1032, %v1048
    %v1057 = vlaneseq
    %v1058 = vshrl.u32 %v1057, 7
    %v1059 = vsub.s32 2, %v1058
    %v1060 = vrot.slane %v25, %v1059
    %v1061 = vmul.f32 %v1049, %v1060
    %v1062 = vmul.f32 %v1050, %v1060
    %v1063 = vmul.f32 %v1051, %v1060
    %v1064 = vmul.f32 %v1052, %v1060
    %v1065 = vmul.f32 %v1053, %v1060
    %v1066 = vmul.f32 %v1054, %v1060
    %v1067 = vmul.f32 %v1055, %v1060
    %v1068 = vmul.f32 %v1056, %v1060
    %v1069 = vlaneseq
    %v1070 = vshrl.u32 %v1069, 7
    %v1071 = vsub.s32 3, %v1070
    %v1072 = vrot.slane %v25, %v1071
    %v1073 = vadd.f32 %v1061, %v1072
    %v1074 = vadd.f32 %v1062, %v1072
    %v1075 = vadd.f32 %v1063, %v1072
    %v1076 = vadd.f32 %v1064, %v1072
    %v1077 = vadd.f32 %v1065, %v1072
    %v1078 = vadd.f32 %v1066, %v1072
    %v1079 = vadd.f32 %v1067, %v1072
    %v1080 = vadd.f32 %v1068, %v1072
    %v1081 = vmul.f32 %v1073, 0.5
    %v1082 = vmul.f32 %v1074, 0.5
    %v1083 = vmul.f32 %v1075, 0.5
    %v1084 = vmul.f32 %v1076, 0.5
    %v1085 = vmul.f32 %v1077, 0.5
    %v1086 = vmul.f32 %v1078, 0.5
    %v1087 = vmul.f32 %v1079, 0.5
    %v1088 = vmul.f32 %v1080, 0.5
    %v1089 = vmul.f32 %v1073, 0.70710677
    %v1090 = vmul.f32 %v1074, 0.70710677
    %v1091 = vmul.f32 %v1075, 0.70710677
    %v1092 = vmul.f32 %v1076, 0.70710677
    %v1093 = vmul.f32 %v1077, 0.70710677
    %v1094 = vmul.f32 %v1078, 0.70710677
    %v1095 = vmul.f32 %v1079, 0.70710677
    %v1096 = vmul.f32 %v1080, 0.70710677
    %v1097 = verf.f32.pop %v1089
    %v1098 = verf.f32.pop %v1090
    %v1099 = verf.f32.pop %v1091
    %v1100 = verf.f32.pop %v1092
    %v1101 = verf.f32.pop %v1093
    %v1102 = verf.f32.pop %v1094
    %v1103 = verf.f32.pop %v1095
    %v1104 = verf.f32.pop %v1096
    %v1105 = vadd.f32 %v1097, 1.0
    %v1106 = vadd.f32 %v1098, 1.0
    %v1107 = vadd.f32 %v1099, 1.0
    %v1108 = vadd.f32 %v1100, 1.0
    %v1109 = vadd.f32 %v1101, 1.0
    %v1110 = vadd.f32 %v1102, 1.0
    %v1111 = vadd.f32 %v1103, 1.0
    %v1112 = vadd.f32 %v1104, 1.0
    %v1113 = vmul.f32 %v1081, %v1105
    %v1114 = vmul.f32 %v1082, %v1106
    %v1115 = vmul.f32 %v1083, %v1107
    %v1116 = vmul.f32 %v1084, %v1108
    %v1117 = vmul.f32 %v1085, %v1109
    %v1118 = vmul.f32 %v1086, %v1110
    %v1119 = vmul.f32 %v1087, %v1111
    %v1120 = vmul.f32 %v1088, %v1112
    %v1121 = vld [vmem:[%s3 + $0x18] sm:$0xff]
    %v1122 = vld [vmem:[%s3 + $0x40] sm:$0xff]
    %v1123 = vld [vmem:[%s3 + $0x68] sm:$0xff]
    %v1124 = vld [vmem:[%s3 + $0x90] sm:$0xff]
    %v1125 = vld [vmem:[%s3 + $0xb8] sm:$0xff]
    %v1126 = vld [vmem:[%s3 + $0xe0] sm:$0xff]
    %v1127 = vld [vmem:[%s3 + $0x108] sm:$0xff]
    %v1128 = vld [vmem:[%s3 + $0x130] sm:$0xff]
    %v1129 = vld [vmem:[%s3 + $0x158] sm:$0xff]
    %v1130 = vld [vmem:[%s3 + $0x180] sm:$0xff]
    %v1131 = vld [vmem:[%s3 + $0x1a8] sm:$0xff]
    %v1132 = vld [vmem:[%s3 + $0x1d0] sm:$0xff]
    %v1133 = vld [vmem:[%s3 + $0x1f8] sm:$0xff]
    %v1134 = vld [vmem:[%s3 + $0x220] sm:$0xff]
    %v1135 = vld [vmem:[%s3 + $0x248] sm:$0xff]
    %v1136 = vld [vmem:[%s3 + $0x270] sm:$0xff]
    %v1137 = vlaneseq
    %v1138 = vshrl.u32 %v1137, 7
    %v1139 = vsub.s32 0, %v1138
    %v1140 = vrot.slane %v25, %v1139
    %1141 = vmatprep.subr.mxu0 0.0
    %1142 = vmatpush1.msra.mxu0 %v1121
    %1143 = vmatprep.subr.mxu0 0.0
    %1144 = vmatpush1.msra.mxu0 %v1122
    %1145 = vmatprep.subr.mxu0 0.0
    %1146 = vmatpush1.msra.mxu0 %v1123
    %1147 = vmatprep.subr.mxu0 0.0
    %1148 = vmatpush1.msra.mxu0 %v1124
    %1149 = vmatprep.subr.mxu0 0.0
    %1150 = vmatpush1.msra.mxu0 %v1125
    %1151 = vmatprep.subr.mxu0 0.0
    %1152 = vmatpush1.msra.mxu0 %v1126
    %1153 = vmatprep.subr.mxu0 0.0
    %1154 = vmatpush1.msra.mxu0 %v1127
    %1155 = vmatprep.subr.mxu0 0.0
    %1156 = vmatpush1.msra.mxu0 %v1128
    %1157 = vmatprep.subr.mxu0 0.0
    %1158 = vmatpush1.msra.mxu0 %v1129
    %1159 = vmatprep.subr.mxu0 0.0
    %1160 = vmatpush1.msra.mxu0 %v1130
    %1161 = vmatprep.subr.mxu0 0.0
    %1162 = vmatpush1.msra.mxu0 %v1131
    %1163 = vmatprep.subr.mxu0 0.0
    %1164 = vmatpush1.msra.mxu0 %v1132
    %1165 = vmatprep.subr.mxu0 0.0
    %1166 = vmatpush1.msra.mxu0 %v1133
    %1167 = vmatprep.subr.mxu0 0.0
    %1168 = vmatpush1.msra.mxu0 %v1134
    %1169 = vmatprep.subr.mxu0 0.0
    %1170 = vmatpush1.msra.mxu0 %v1135
    %1171 = vmatprep.subr.mxu0 0.0
    %1172 = vmatpush1.msra.mxu0 %v1136
    %1173 = vmatprep.subr.mxu0 0.0
    %1174 = vmatpush1.msra.mxu0 0.0
    %1175 = vmatprep.subr.mxu0 0.0
    %1176 = vmatpush1.msra.mxu0 0.0
    %1177 = vmatprep.subr.mxu0 0.0
    %1178 = vmatpush1.msra.mxu0 0.0
    %1179 = vmatprep.subr.mxu0 0.0
    %1180 = vmatpush1.msra.mxu0 0.0
    %1181 = vmatprep.subr.mxu0 0.0
    %1182 = vmatpush1.msra.mxu0 0.0
    %1183 = vmatprep.subr.mxu0 0.0
    %1184 = vmatpush1.msra.mxu0 0.0
    %1185 = vmatprep.subr.mxu0 0.0
    %1186 = vmatpush1.msra.mxu0 0.0
    %1187 = vmatprep.subr.mxu0 0.0
    %1188 = vmatpush1.msra.mxu0 0.0
    %1189 = vmatprep.subr.mxu0 0.0
    %1190 = vmatpush1.msra.mxu0 0.0
    %1191 = vmatprep.subr.mxu0 0.0
    %1192 = vmatpush1.msra.mxu0 0.0
    %1193 = vmatprep.subr.mxu0 0.0
    %1194 = vmatpush1.msra.mxu0 0.0
    %1195 = vmatprep.subr.mxu0 0.0
    %1196 = vmatpush1.msra.mxu0 0.0
    %1197 = vmatprep.subr.mxu0 0.0
    %1198 = vmatpush1.msra.mxu0 0.0
    %1199 = vmatprep.subr.mxu0 0.0
    %1200 = vmatpush1.msra.mxu0 0.0
    %1201 = vmatprep.subr.mxu0 0.0
    %1202 = vmatpush1.msra.mxu0 0.0
    %1203 = vmatprep.subr.mxu0 0.0
    %1204 = vmatpush1.msra.mxu0 0.0
    %1205 = vmatprep.mubr.f32.mxu0 0.0
    %1206 = vmatmul.mubr.f32.gmra.mrb[0].mxu0 %v933
    %v1207 = vpop.f32.mrb[0].mxu0
    %v1208 = vadd.f32 %v1140, %v1207
    %v1209 = vpop.f32.mrb[0].mxu0
    %1210 = vmatprep.mubr.f32.mxu0 0.0
    %1211 = vmatmul.mubr.f32.gmra.mrb[0].mxu0 %v934
    %v1212 = vpop.f32.mrb[0].mxu0
    %v1213 = vadd.f32 %v1140, %v1212
    %v1214 = vpop.f32.mrb[0].mxu0
    %1215 = vmatprep.mubr.f32.mxu0 0.0
    %1216 = vmatmul.mubr.f32.gmra.mrb[0].mxu0 %v935
    %v1217 = vpop.f32.mrb[0].mxu0
    %v1218 = vadd.f32 %v1140, %v1217
    %v1219 = vpop.f32.mrb[0].mxu0
    %1220 = vmatprep.mubr.f32.mxu0 0.0
    %1221 = vmatmul.mubr.f32.gmra.mrb[0].mxu0 %v936
    %v1222 = vpop.f32.mrb[0].mxu0
    %v1223 = vadd.f32 %v1140, %v1222
    %v1224 = vpop.f32.mrb[0].mxu0
    %1225 = vmatprep.mubr.f32.mxu0 0.0
    %1226 = vmatmul.mubr.f32.gmra.mrb[0].mxu0 %v937
    %v1227 = vpop.f32.mrb[0].mxu0
    %v1228 = vadd.f32 %v1140, %v1227
    %v1229 = vpop.f32.mrb[0].mxu0
    %1230 = vmatprep.mubr.f32.mxu0 0.0
    %1231 = vmatmul.mubr.f32.gmra.mrb[0].mxu0 %v938
    %v1232 = vpop.f32.mrb[0].mxu0
    %v1233 = vadd.f32 %v1140, %v1232
    %v1234 = vpop.f32.mrb[0].mxu0
    %1235 = vmatprep.mubr.f32.mxu0 0.0
    %1236 = vmatmul.mubr.f32.gmra.mrb[0].mxu0 %v939
    %v1237 = vpop.f32.mrb[0].mxu0
    %v1238 = vadd.f32 %v1140, %v1237
    %v1239 = vpop.f32.mrb[0].mxu0
    %1240 = vmatprep.mubr.f32.mxu0 0.0
    %1241 = vmatmul.mubr.f32.gmra.mrb[0].mxu0 %v940
    %v1242 = vpop.f32.mrb[0].mxu0
    %v1243 = vadd.f32 %v1140, %v1242
    %v1244 = vpop.f32.mrb[0].mxu0
    %1245 = vdwg.mxu0
    %v1246 = vld [vmem:[%s3 + $0x20] sm:$0xff]
    %v1247 = vld [vmem:[%s3 + $0x48] sm:$0xff]
    %v1248 = vld [vmem:[%s3 + $0x70] sm:$0xff]
    %v1249 = vld [vmem:[%s3 + $0x98] sm:$0xff]
    %v1250 = vld [vmem:[%s3 + $0xc0] sm:$0xff]
    %v1251 = vld [vmem:[%s3 + $0xe8] sm:$0xff]
    %v1252 = vld [vmem:[%s3 + $0x110] sm:$0xff]
    %v1253 = vld [vmem:[%s3 + $0x138] sm:$0xff]
    %v1254 = vld [vmem:[%s3 + $0x160] sm:$0xff]
    %v1255 = vld [vmem:[%s3 + $0x188] sm:$0xff]
    %v1256 = vld [vmem:[%s3 + $0x1b0] sm:$0xff]
    %v1257 = vld [vmem:[%s3 + $0x1d8] sm:$0xff]
    %v1258 = vld [vmem:[%s3 + $0x200] sm:$0xff]
    %v1259 = vld [vmem:[%s3 + $0x228] sm:$0xff]
    %v1260 = vld [vmem:[%s3 + $0x250] sm:$0xff]
    %v1261 = vld [vmem:[%s3 + $0x278] sm:$0xff]
    %v1262 = vlaneseq
    %v1263 = vshrl.u32 %v1262, 7
    %v1264 = vsub.s32 4, %v1263
    %v1265 = vrot.slane %v25, %v1264
    %1266 = vmatprep.subr.mxu0 0.0
    %1267 = vmatpush1.msra.mxu0 %v1246
    %1268 = vmatprep.subr.mxu0 0.0
    %1269 = vmatpush1.msra.mxu0 %v1247
    %1270 = vmatprep.subr.mxu0 0.0
    %1271 = vmatpush1.msra.mxu0 %v1248
    %1272 = vmatprep.subr.mxu0 0.0
    %1273 = vmatpush1.msra.mxu0 %v1249
    %1274 = vmatprep.subr.mxu0 0.0
    %1275 = vmatpush1.msra.mxu0 %v1250
    %1276 = vmatprep.subr.mxu0 0.0
    %1277 = vmatpush1.msra.mxu0 %v1251
    %1278 = vmatprep.subr.mxu0 0.0
    %1279 = vmatpush1.msra.mxu0 %v1252
    %1280 = vmatprep.subr.mxu0 0.0
    %1281 = vmatpush1.msra.mxu0 %v1253
    %1282 = vmatprep.subr.mxu0 0.0
    %1283 = vmatpush1.msra.mxu0 %v1254
    %1284 = vmatprep.subr.mxu0 0.0
    %1285 = vmatpush1.msra.mxu0 %v1255
    %1286 = vmatprep.subr.mxu0 0.0
    %1287 = vmatpush1.msra.mxu0 %v1256
    %1288 = vmatprep.subr.mxu0 0.0
    %1289 = vmatpush1.msra.mxu0 %v1257
    %1290 = vmatprep.subr.mxu0 0.0
    %1291 = vmatpush1.msra.mxu0 %v1258
    %1292 = vmatprep.subr.mxu0 0.0
    %1293 = vmatpush1.msra.mxu0 %v1259
    %1294 = vmatprep.subr.mxu0 0.0
    %1295 = vmatpush1.msra.mxu0 %v1260
    %1296 = vmatprep.subr.mxu0 0.0
    %1297 = vmatpush1.msra.mxu0 %v1261
    %1298 = vmatprep.subr.mxu0 0.0
    %1299 = vmatpush1.msra.mxu0 0.0
    %1300 = vmatprep.subr.mxu0 0.0
    %1301 = vmatpush1.msra.mxu0 0.0
    %1302 = vmatprep.subr.mxu0 0.0
    %1303 = vmatpush1.msra.mxu0 0.0
    %1304 = vmatprep.subr.mxu0 0.0
    %1305 = vmatpush1.msra.mxu0 0.0
    %1306 = vmatprep.subr.mxu0 0.0
    %1307 = vmatpush1.msra.mxu0 0.0
    %1308 = vmatprep.subr.mxu0 0.0
    %1309 = vmatpush1.msra.mxu0 0.0
    %1310 = vmatprep.subr.mxu0 0.0
    %1311 = vmatpush1.msra.mxu0 0.0
    %1312 = vmatprep.subr.mxu0 0.0
    %1313 = vmatpush1.msra.mxu0 0.0
    %1314 = vmatprep.subr.mxu0 0.0
    %1315 = vmatpush1.msra.mxu0 0.0
    %1316 = vmatprep.subr.mxu0 0.0
    %1317 = vmatpush1.msra.mxu0 0.0
    %1318 = vmatprep.subr.mxu0 0.0
    %1319 = vmatpush1.msra.mxu0 0.0
    %1320 = vmatprep.subr.mxu0 0.0
    %1321 = vmatpush1.msra.mxu0 0.0
    %1322 = vmatprep.subr.mxu0 0.0
    %1323 = vmatpush1.msra.mxu0 0.0
    %1324 = vmatprep.subr.mxu0 0.0
    %1325 = vmatpush1.msra.mxu0 0.0
    %1326 = vmatprep.subr.mxu0 0.0
    %1327 = vmatpush1.msra.mxu0 0.0
    %1328 = vmatprep.subr.mxu0 0.0
    %1329 = vmatpush1.msra.mxu0 0.0
    %1330 = vmatprep.mubr.f32.mxu0 0.0
    %1331 = vmatmul.mubr.f32.gmra.mrb[0].mxu0 %v1113
    %v1332 = vpop.f32.mrb[0].mxu0
    %v1333 = vadd.f32 %v1265, %v1332
    %v1334 = vpop.f32.mrb[0].mxu0
    %1335 = vmatprep.mubr.f32.mxu0 0.0
    %1336 = vmatmul.mubr.f32.gmra.mrb[0].mxu0 %v1114
    %v1337 = vpop.f32.mrb[0].mxu0
    %v1338 = vadd.f32 %v1265, %v1337
    %v1339 = vpop.f32.mrb[0].mxu0
    %1340 = vmatprep.mubr.f32.mxu0 0.0
    %1341 = vmatmul.mubr.f32.gmra.mrb[0].mxu0 %v1115
    %v1342 = vpop.f32.mrb[0].mxu0
    %v1343 = vadd.f32 %v1265, %v1342
    %v1344 = vpop.f32.mrb[0].mxu0
    %1345 = vmatprep.mubr.f32.mxu0 0.0
    %1346 = vmatmul.mubr.f32.gmra.mrb[0].mxu0 %v1116
    %v1347 = vpop.f32.mrb[0].mxu0
    %v1348 = vadd.f32 %v1265, %v1347
    %v1349 = vpop.f32.mrb[0].mxu0
    %1350 = vmatprep.mubr.f32.mxu0 0.0
    %1351 = vmatmul.mubr.f32.gmra.mrb[0].mxu0 %v1117
    %v1352 = vpop.f32.mrb[0].mxu0
    %v1353 = vadd.f32 %v1265, %v1352
    %v1354 = vpop.f32.mrb[0].mxu0
    %1355 = vmatprep.mubr.f32.mxu0 0.0
    %1356 = vmatmul.mubr.f32.gmra.mrb[0].mxu0 %v1118
    %v1357 = vpop.f32.mrb[0].mxu0
    %v1358 = vadd.f32 %v1265, %v1357
    %v1359 = vpop.f32.mrb[0].mxu0
    %1360 = vmatprep.mubr.f32.mxu0 0.0
    %1361 = vmatmul.mubr.f32.gmra.mrb[0].mxu0 %v1119
    %v1362 = vpop.f32.mrb[0].mxu0
    %v1363 = vadd.f32 %v1265, %v1362
    %v1364 = vpop.f32.mrb[0].mxu0
    %1365 = vmatprep.mubr.f32.mxu0 0.0
    %1366 = vmatmul.mubr.f32.gmra.mrb[0].mxu0 %v1120
    %v1367 = vpop.f32.mrb[0].mxu0
    %v1368 = vadd.f32 %v1265, %v1367
    %v1369 = vpop.f32.mrb[0].mxu0
    %1370 = vdwg.mxu0
    %v1371 = vmul.f32 %v1208, %v1208
    %v1372 = vmul.f32 %v1213, %v1213
    %v1373 = vmul.f32 %v1218, %v1218
    %v1374 = vmul.f32 %v1223, %v1223
    %v1375 = vmul.f32 %v1228, %v1228
    %v1376 = vmul.f32 %v1233, %v1233
    %v1377 = vmul.f32 %v1238, %v1238
    %v1378 = vmul.f32 %v1243, %v1243
    %1379 = vadd.xlane.f32.xlu0 %v1371
    %v1380 = vpop.xlane.xlu0 %1379
    %1381 = vadd.xlane.f32.xlu0 %v1372
    %v1382 = vpop.xlane.xlu0 %1381
    %1383 = vadd.xlane.f32.xlu0 %v1373
    %v1384 = vpop.xlane.xlu0 %1383
    %1385 = vadd.xlane.f32.xlu0 %v1374
    %v1386 = vpop.xlane.xlu0 %1385
    %1387 = vadd.xlane.f32.xlu0 %v1375
    %v1388 = vpop.xlane.xlu0 %1387
    %1389 = vadd.xlane.f32.xlu0 %v1376
    %v1390 = vpop.xlane.xlu0 %1389
    %1391 = vadd.xlane.f32.xlu0 %v1377
    %v1392 = vpop.xlane.xlu0 %1391
    %1393 = vadd.xlane.f32.xlu0 %v1378
    %v1394 = vpop.xlane.xlu0 %1393
    %v1395 = vmax.f32 %v1380, 1e-24
    %v1396 = vmax.f32 %v1382, 1e-24
    %v1397 = vmax.f32 %v1384, 1e-24
    %v1398 = vmax.f32 %v1386, 1e-24
    %v1399 = vmax.f32 %v1388, 1e-24
    %v1400 = vmax.f32 %v1390, 1e-24
    %v1401 = vmax.f32 %v1392, 1e-24
    %v1402 = vmax.f32 %v1394, 1e-24
    %v1403 = vrsqrt.pop %v1395
    %v1404 = vrsqrt.pop %v1396
    %v1405 = vrsqrt.pop %v1397
    %v1406 = vrsqrt.pop %v1398
    %v1407 = vrsqrt.pop %v1399
    %v1408 = vrsqrt.pop %v1400
    %v1409 = vrsqrt.pop %v1401
    %v1410 = vrsqrt.pop %v1402
    %v1411 = vmul.f32 %v1208, %v1403
    %v1412 = vmul.f32 %v1213, %v1404
    %v1413 = vmul.f32 %v1218, %v1405
    %v1414 = vmul.f32 %v1223, %v1406
    %v1415 = vmul.f32 %v1228, %v1407
    %v1416 = vmul.f32 %v1233, %v1408
    %v1417 = vmul.f32 %v1238, %v1409
    %v1418 = vmul.f32 %v1243, %v1410
    %1419 = vst [vmem:[#allocation2] sm:$0xff] %v1411
    %1420 = vst [vmem:[#allocation2 + $0x8] sm:$0xff] %v1412
    %1421 = vst [vmem:[#allocation2 + $0x10] sm:$0xff] %v1413
    %1422 = vst [vmem:[#allocation2 + $0x18] sm:$0xff] %v1414
    %1423 = vst [vmem:[#allocation2 + $0x20] sm:$0xff] %v1415
    %1424 = vst [vmem:[#allocation2 + $0x28] sm:$0xff] %v1416
    %1425 = vst [vmem:[#allocation2 + $0x30] sm:$0xff] %v1417
    %1426 = vst [vmem:[#allocation2 + $0x38] sm:$0xff] %v1418
    %v1427 = vmul.f32 %v1333, %v1333
    %v1428 = vmul.f32 %v1338, %v1338
    %v1429 = vmul.f32 %v1343, %v1343
    %v1430 = vmul.f32 %v1348, %v1348
    %v1431 = vmul.f32 %v1353, %v1353
    %v1432 = vmul.f32 %v1358, %v1358
    %v1433 = vmul.f32 %v1363, %v1363
    %v1434 = vmul.f32 %v1368, %v1368
    %1435 = vadd.xlane.f32.xlu0 %v1427
    %v1436 = vpop.xlane.xlu0 %1435
    %1437 = vadd.xlane.f32.xlu0 %v1428
    %v1438 = vpop.xlane.xlu0 %1437
    %1439 = vadd.xlane.f32.xlu0 %v1429
    %v1440 = vpop.xlane.xlu0 %1439
    %1441 = vadd.xlane.f32.xlu0 %v1430
    %v1442 = vpop.xlane.xlu0 %1441
    %1443 = vadd.xlane.f32.xlu0 %v1431
    %v1444 = vpop.xlane.xlu0 %1443
    %1445 = vadd.xlane.f32.xlu0 %v1432
    %v1446 = vpop.xlane.xlu0 %1445
    %1447 = vadd.xlane.f32.xlu0 %v1433
    %v1448 = vpop.xlane.xlu0 %1447
    %1449 = vadd.xlane.f32.xlu0 %v1434
    %v1450 = vpop.xlane.xlu0 %1449
    %v1451 = vmax.f32 %v1436, 1e-24
    %v1452 = vmax.f32 %v1438, 1e-24
    %v1453 = vmax.f32 %v1440, 1e-24
    %v1454 = vmax.f32 %v1442, 1e-24
    %v1455 = vmax.f32 %v1444, 1e-24
    %v1456 = vmax.f32 %v1446, 1e-24
    %v1457 = vmax.f32 %v1448, 1e-24
    %v1458 = vmax.f32 %v1450, 1e-24
    %v1459 = vrsqrt.pop %v1451
    %v1460 = vrsqrt.pop %v1452
    %v1461 = vrsqrt.pop %v1453
    %v1462 = vrsqrt.pop %v1454
    %v1463 = vrsqrt.pop %v1455
    %v1464 = vrsqrt.pop %v1456
    %v1465 = vrsqrt.pop %v1457
    %v1466 = vrsqrt.pop %v1458
    %v1467 = vmul.f32 %v1333, %v1459
    %v1468 = vmul.f32 %v1338, %v1460
    %v1469 = vmul.f32 %v1343, %v1461
    %v1470 = vmul.f32 %v1348, %v1462
    %v1471 = vmul.f32 %v1353, %v1463
    %v1472 = vmul.f32 %v1358, %v1464
    %v1473 = vmul.f32 %v1363, %v1465
    %v1474 = vmul.f32 %v1368, %v1466
    %1475 = vst [vmem:[#allocation4] sm:$0xff] %v1467
    %1476 = vst [vmem:[#allocation4 + $0x8] sm:$0xff] %v1468
    %1477 = vst [vmem:[#allocation4 + $0x10] sm:$0xff] %v1469
    %1478 = vst [vmem:[#allocation4 + $0x18] sm:$0xff] %v1470
    %1479 = vst [vmem:[#allocation4 + $0x20] sm:$0xff] %v1471
    %1480 = vst [vmem:[#allocation4 + $0x28] sm:$0xff] %v1472
    %1481 = vst [vmem:[#allocation4 + $0x30] sm:$0xff] %v1473
    %1482 = vst [vmem:[#allocation4 + $0x38] sm:$0xff] %v1474
    // Predicated region
    $region22: #{token_generator_forward.1} parent=1 // pred_check
      _
    $region23: #{token_generator_forward.1} parent=1 // pred_check_branch
      %1484 = sbr.rel (0) target = $region25
    $region24: #{token_generator_forward.1} parent=1 // pred_region
      %s1486 = ssub.s32 1024, 1024
      %1487 = vsyncadd [#allocation3], %s1486
      %s1488 = sshll.u32 [#allocation2], 4
      %s1489 = int_to_ptr.vmem [resolvable:$true] %s1488
      %1494 = dma.vmem_to_hbm [thread:$0]  %s1489, 1024, %s5, [#allocation3], 128, 128, 8
    $region25: #{token_generator_forward.1} parent=1 // pred_fallthru
      _
    // Predicated region
    $region26: #{token_generator_forward.1} parent=1 // pred_check
      _
    $region27: #{token_generator_forward.1} parent=1 // pred_check_branch
      %1496 = sbr.rel (0) target = $region29
    $region28: #{token_generator_forward.1} parent=1 // pred_region
      %s1498 = ssub.s32 1024, 1024
      %1499 = vsyncadd [#allocation5], %s1498
      %s1500 = sshll.u32 [#allocation4], 4
      %s1501 = int_to_ptr.vmem [resolvable:$true] %s1500
      %1506 = dma.vmem_to_hbm [thread:$0]  %s1501, 1024, %s6, [#allocation5], 128, 128, 8
    $region29: #{token_generator_forward.1} parent=1 // pred_fallthru
      _
    // Predicated region
    $region30: #{token_generator_forward.1} parent=1 // pred_check
      _
    $region31: #{token_generator_forward.1} parent=1 // pred_check_branch
      %1508 = sbr.rel (0) target = $region33
    $region32: #{token_generator_forward.1} parent=1 // pred_region
      %1509 = dma.done [#allocation3], 1024
    $region33: #{token_generator_forward.1} parent=1 // pred_fallthru
      _
    // Predicated region
    $region34: #{token_generator_forward.1} parent=1 // pred_check
      _
    $region35: #{token_generator_forward.1} parent=1 // pred_check_branch
      %1511 = sbr.rel (0) target = $region37
    $region36: #{token_generator_forward.1} parent=1 // pred_region
      %1512 = dma.done [#allocation5], 1024
    $region37: #{token_generator_forward.1} parent=1 // pred_fallthru
      _
    %1513 = vsyncpa [#allocation3], 1
    %1514 = vsyncpa [#allocation5], 1

</llo_original>
